<compile_context>
chip_gen: v7x
topology: tpu7x:2x2x1
jax: 0.10.0
libtpu: 0.0.40
codegen_flags: <defaults>
</compile_context>

<pallas_src>
import math
import functools

import jax
import jax.numpy as jnp
from jax import lax
from jax.experimental import pallas as pl
from jax.experimental.pallas import tpu as pltpu


# ---------------------------------------------------------------------------
# In-kernel helpers
# ---------------------------------------------------------------------------
def _erf(x):
    # Abramowitz & Stegun 7.1.26 rational approximation (max abs err ~1.5e-7),
    # matching torch.nn.GELU()'s exact-erf GELU. Exact divide (EUP reciprocal
    # + refinement) rather than approx reciprocal to avoid numeric drift.
    p = 0.3275911
    a1, a2, a3, a4, a5 = (0.254829592, -0.284496736, 1.421413741,
                          -1.453152027, 1.061405429)
    sgn = jnp.where(x >= 0.0, 1.0, -1.0)
    ax = jnp.abs(x)
    t = 1.0 / (1.0 + p * ax)
    poly = ((((a5 * t + a4) * t + a3) * t + a2) * t + a1) * t
    return sgn * (1.0 - poly * jnp.exp(-ax * ax))


def _gelu_exact(x):
    return 0.5 * x * (1.0 + _erf(x * (1.0 / math.sqrt(2.0))))


def _layer_norm(h, gamma, beta, eps=1e-5):
    # Two-pass (centered) variance: robust against cancellation.
    mu = jnp.mean(h, axis=-1, keepdims=True)
    xc = h - mu
    var = jnp.mean(xc * xc, axis=-1, keepdims=True)
    return xc * lax.rsqrt(var + eps) * gamma + beta


# ---------------------------------------------------------------------------
# Fused TransformerBlock kernel: grid = (batch, q-row-tile)
# ---------------------------------------------------------------------------
def transformer_block_kernel(x_ref,
                             ln1g_ref, ln1b_ref,
                             wq_ref, bq_ref, wk_ref, bk_ref,
                             wv_ref, bv_ref, wo_ref, bo_ref,
                             ln2g_ref, ln2b_ref,
                             w1_ref, b1_ref, w2_ref, b2_ref,
                             out_ref,
                             h1_scr, k_scr, v_scr, ctx_scr,
                             *, num_heads, head_dim, block_t):
    md = wq_ref.dtype            # matmul operand dtype (bf16 in perf config)
    f32 = jnp.float32
    T, D = x_ref.shape           # batch dim is squeezed out of the block
    scale = 1.0 / math.sqrt(head_dim)

    t_idx = pl.program_id(1)

    # ---- per-batch prologue (t-tile 0 only): cache LN1(x), K, V in VMEM ----
    @pl.when(t_idx == 0)
    def _():
        x_full = x_ref[...].astype(f32)                               # (T, D)
        h_full = _layer_norm(x_full, ln1g_ref[...], ln1b_ref[...])
        h_md = h_full.astype(md)
        h1_scr[...] = h_md
        k_scr[...] = (jnp.dot(h_md, wk_ref[...],
                              preferred_element_type=f32) + bk_ref[...]).astype(md)
        v_scr[...] = (jnp.dot(h_md, wv_ref[...],
                              preferred_element_type=f32) + bv_ref[...]).astype(md)

    # ---- per q-tile: x + MHA(LN1(x)) ----
    row0 = pl.multiple_of(t_idx * block_t, block_t)
    x_tile = x_ref[pl.ds(row0, block_t), :].astype(f32)               # (bt, D)
    h_q = h1_scr[pl.ds(row0, block_t), :]                             # (bt, D) md

    q = (jnp.dot(h_q, wq_ref[...], preferred_element_type=f32)
         + bq_ref[...]) * scale
    q_md = q.astype(md)          # cast once, outside the head loop

    qk_dims = (((1,), (1,)), ((), ()))    # contract last dims -> no K transpose
    for h in range(num_heads):            # short static loop; ctx stores bound
        sl = slice(h * head_dim, (h + 1) * head_dim)   # per-head live ranges
        s = lax.dot_general(q_md[:, sl], k_scr[:, sl], qk_dims,
                            preferred_element_type=f32)               # (bt, T)
        s = s - jnp.max(s, axis=-1, keepdims=True)
        p = jnp.exp(s)
        p = p * pl.reciprocal(jnp.sum(p, axis=-1, keepdims=True), approx=True)
        oh = jnp.dot(p.astype(md), v_scr[:, sl],
                     preferred_element_type=f32)                      # (bt, hd)
        ctx_scr[:, sl] = oh.astype(md)    # lane-slice store (no XLU concat)

    # Single K=D output projection (full MXU cadence on v6e/v7x).
    attn = jnp.dot(ctx_scr[...], wo_ref[...],
                   preferred_element_type=f32) + bo_ref[...]
    x1 = x_tile + attn

    # ---- x + FF(LN2(x)) ----
    h2 = _layer_norm(x1, ln2g_ref[...], ln2b_ref[...])
    ff = jnp.dot(h2.astype(md), w1_ref[...],
                 preferred_element_type=f32) + b1_ref[...]
    ff = _gelu_exact(ff)
    ff = jnp.dot(ff.astype(md), w2_ref[...],
                 preferred_element_type=f32) + b2_ref[...]

    out_ref[...] = (x1 + ff).astype(out_ref.dtype)


# ---------------------------------------------------------------------------
# Wrapper
# ---------------------------------------------------------------------------
def _pick_vmem_limit():
    """Per-chip VMEM scoped limit with headroom (v7x: ~52 MiB of 64; v5e/v6e: ~104 of 128)."""
    try:
        cap = pltpu.get_tpu_info().vmem_capacity_bytes
        return int(cap * 13 // 16)
    except Exception:
        return 48 * 1024 * 1024   # safe on every generation


def transformer_block(x, params, num_heads, *,
                      block_t=256, matmul_dtype=jnp.bfloat16,
                      vmem_limit_bytes=None):
    B, T, D = x.shape
    assert D % num_heads == 0, "dim must be divisible by num_heads"
    head_dim = D // num_heads

    # Query-row tile: must divide T and be a multiple of 8 sublanes.
    block_t = min(block_t, T)
    if T % block_t != 0 or block_t % 8 != 0:
        block_t = T
    n_t = T // block_t

    if vmem_limit_bytes is None:
        vmem_limit_bytes = _pick_vmem_limit()

    def mm(w):   # bf16 matmul operands: halves weight footprint, bf16 MXU rate
        return w.astype(matmul_dtype)

    weights = [
        params["ln1_g"], params["ln1_b"],
        mm(params["wq"]), params["bq"], mm(params["wk"]), params["bk"],
        mm(params["wv"]), params["bv"], mm(params["wo"]), params["bo"],
        params["ln2_g"], params["ln2_b"],
        mm(params["w1"]), params["b1"], mm(params["w2"]), params["b2"],
    ]

    # Weights / biases / LN params: whole-array VMEM residents. A single copy
    # lives in VMEM for the entire kernel (no double-buffering, no per-step DMA).
    resident = pl.BlockSpec(memory_space=pltpu.MemorySpace.VMEM)

    in_specs = [pl.BlockSpec((None, T, D), lambda b, t: (b, 0, 0))]  # full seq / batch
    in_specs += [resident] * len(weights)
    out_spec = pl.BlockSpec((None, block_t, D), lambda b, t: (b, t, 0))

    kernel = functools.partial(transformer_block_kernel,
                               num_heads=num_heads, head_dim=head_dim,
                               block_t=block_t)

    return pl.pallas_call(
        kernel,
        out_shape=jax.ShapeDtypeStruct((B, T, D), x.dtype),
        grid_spec=pltpu.PrefetchScalarGridSpec(
            num_scalar_prefetch=0,
            grid=(B, n_t),
            in_specs=in_specs,
            out_specs=out_spec,
            scratch_shapes=[
                pltpu.VMEM((T, D), matmul_dtype),        # cached LN1(x)
                pltpu.VMEM((T, D), matmul_dtype),        # cached K
                pltpu.VMEM((T, D), matmul_dtype),        # cached V
                pltpu.VMEM((block_t, D), matmul_dtype),  # per-head ctx buffer
            ]),
        compiler_params=pltpu.CompilerParams(
            # t-axis carries the per-batch K/V cache state -> "arbitrary";
            # batch axis stays "parallel" for megacore sharding.
            dimension_semantics=("parallel", "arbitrary"),
            vmem_limit_bytes=vmem_limit_bytes),
    )(x, *weights)


# ---------------------------------------------------------------------------
# Pure-JAX reference (correctness check)
# ---------------------------------------------------------------------------
def transformer_block_ref(x, p, num_heads):
    B, T, D = x.shape
    hd = D // num_heads

    def ln(h, g, b):
        mu = h.mean(-1, keepdims=True)
        var = ((h - mu) ** 2).mean(-1, keepdims=True)
        return (h - mu) / jnp.sqrt(var + 1e-5) * g + b

    h = ln(x, p["ln1_g"], p["ln1_b"])
    q = (h @ p["wq"] + p["bq"]).reshape(B, T, num_heads, hd).transpose(0, 2, 1, 3)
    k = (h @ p["wk"] + p["bk"]).reshape(B, T, num_heads, hd).transpose(0, 2, 1, 3)
    v = (h @ p["wv"] + p["bv"]).reshape(B, T, num_heads, hd).transpose(0, 2, 1, 3)
    s = (q @ jnp.swapaxes(k, -1, -2)) / math.sqrt(hd)
    a = jax.nn.softmax(s, axis=-1)
    o = (a @ v).transpose(0, 2, 1, 3).reshape(B, T, D)
    o = o @ p["wo"] + p["bo"]
    x1 = x + o
    h2 = ln(x1, p["ln2_g"], p["ln2_b"])
    ff = jax.nn.gelu(h2 @ p["w1"] + p["b1"], approximate=False)
    ff = ff @ p["w2"] + p["b2"]
    return x1 + ff


# ---------------------------------------------------------------------------
if __name__ == "__main__":
    B, T, D, H = 2, 16, 32, 4
    key = jax.random.PRNGKey(0)
    keys = jax.random.split(key, 16)

    def w(k, shape, scale=0.02):
        return (scale * jax.random.normal(k, shape)).astype(jnp.float32)

    params = {
        "ln1_g": jnp.ones((1, D), jnp.float32),
        "ln1_b": jnp.zeros((1, D), jnp.float32),
        "wq": w(keys[0], (D, D)), "bq": w(keys[1], (1, D)),
        "wk": w(keys[2], (D, D)), "bk": w(keys[3], (1, D)),
        "wv": w(keys[4], (D, D)), "bv": w(keys[5], (1, D)),
        "wo": w(keys[6], (D, D)), "bo": w(keys[7], (1, D)),
        "ln2_g": jnp.ones((1, D), jnp.float32),
        "ln2_b": jnp.zeros((1, D), jnp.float32),
        "w1": w(keys[8], (D, 4 * D)), "b1": w(keys[9], (1, 4 * D)),
        "w2": w(keys[10], (4 * D, D)), "b2": w(keys[11], (1, D)),
    }

    x = jax.random.normal(keys[12], (B, T, D), dtype=jnp.float32)
    ref = transformer_block_ref(x, params, num_heads=H)

    # f32 matmul path, single q-tile (block_t == T).
    out_f32 = jax.block_until_ready(
        transformer_block(x, params, num_heads=H, matmul_dtype=jnp.float32))
    assert out_f32.shape == (B, T, D)
    assert jnp.allclose(out_f32, ref, atol=2e-3, rtol=2e-3), (
        float(jnp.max(jnp.abs(out_f32 - ref))))

    # f32 matmul path, two q-tiles -> exercises the per-batch K/V/LN1 cache.
    out_f32_t = jax.block_until_ready(
        transformer_block(x, params, num_heads=H, matmul_dtype=jnp.float32,
                          block_t=8))
    assert jnp.allclose(out_f32_t, ref, atol=2e-3, rtol=2e-3), (
        float(jnp.max(jnp.abs(out_f32_t - ref))))

    # bf16-matmul / f32-accumulate path (production perf configuration).
    out_bf16 = jax.block_until_ready(
        transformer_block(x, params, num_heads=H, matmul_dtype=jnp.bfloat16,
                          block_t=8))
    assert out_bf16.shape == (B, T, D)
    assert jnp.allclose(out_bf16, ref, atol=2e-2, rtol=2e-2), (
        float(jnp.max(jnp.abs(out_bf16 - ref))))

    print("KERNEL_OK")
</pallas_src>

<mosaic_0001>
module attributes {stable_mosaic.version = 11 : i64} {
  func.func @transformer_block_kernel(%arg0: i32, %arg1: i32, %arg2: memref<1x16x32xf32, #tpu.memory_space<vmem>>, %arg3: memref<1x32xf32, #tpu.memory_space<vmem>>, %arg4: memref<1x32xf32, #tpu.memory_space<vmem>>, %arg5: memref<32x32xf32, #tpu.memory_space<vmem>>, %arg6: memref<1x32xf32, #tpu.memory_space<vmem>>, %arg7: memref<32x32xf32, #tpu.memory_space<vmem>>, %arg8: memref<1x32xf32, #tpu.memory_space<vmem>>, %arg9: memref<32x32xf32, #tpu.memory_space<vmem>>, %arg10: memref<1x32xf32, #tpu.memory_space<vmem>>, %arg11: memref<32x32xf32, #tpu.memory_space<vmem>>, %arg12: memref<1x32xf32, #tpu.memory_space<vmem>>, %arg13: memref<1x32xf32, #tpu.memory_space<vmem>>, %arg14: memref<1x32xf32, #tpu.memory_space<vmem>>, %arg15: memref<32x128xf32, #tpu.memory_space<vmem>>, %arg16: memref<1x128xf32, #tpu.memory_space<vmem>>, %arg17: memref<128x32xf32, #tpu.memory_space<vmem>>, %arg18: memref<1x32xf32, #tpu.memory_space<vmem>>, %arg19: memref<1x16x32xf32, #tpu.memory_space<vmem>>, %arg20: memref<16x32xf32, #tpu.memory_space<vmem>>, %arg21: memref<16x32xf32, #tpu.memory_space<vmem>>, %arg22: memref<16x32xf32, #tpu.memory_space<vmem>>, %arg23: memref<16x32xf32, #tpu.memory_space<vmem>>) attributes {dimension_semantics = [#tpu.dimension_semantics<parallel>, #tpu.dimension_semantics<arbitrary>], iteration_bounds = array<i64: 2, 1>, scalar_prefetch = 0 : i64, scratch_operands = 4 : i64, tpu.core_type = #tpu.core_type<tc>, window_params = [{transform_indices = @transform_0, window_bounds = array<i64: 1, 16, 32>}, {pipeline_mode = #tpu.pipeline_mode<synchronous>, transform_indices = @transform_1, window_bounds = array<i64: 1, 32>}, {pipeline_mode = #tpu.pipeline_mode<synchronous>, transform_indices = @transform_2, window_bounds = array<i64: 1, 32>}, {pipeline_mode = #tpu.pipeline_mode<synchronous>, transform_indices = @transform_3, window_bounds = array<i64: 32, 32>}, {pipeline_mode = #tpu.pipeline_mode<synchronous>, transform_indices = @transform_4, window_bounds = array<i64: 1, 32>}, {pipeline_mode = #tpu.pipeline_mode<synchronous>, transform_indices = @transform_5, window_bounds = array<i64: 32, 32>}, {pipeline_mode = #tpu.pipeline_mode<synchronous>, transform_indices = @transform_6, window_bounds = array<i64: 1, 32>}, {pipeline_mode = #tpu.pipeline_mode<synchronous>, transform_indices = @transform_7, window_bounds = array<i64: 32, 32>}, {pipeline_mode = #tpu.pipeline_mode<synchronous>, transform_indices = @transform_8, window_bounds = array<i64: 1, 32>}, {pipeline_mode = #tpu.pipeline_mode<synchronous>, transform_indices = @transform_9, window_bounds = array<i64: 32, 32>}, {pipeline_mode = #tpu.pipeline_mode<synchronous>, transform_indices = @transform_10, window_bounds = array<i64: 1, 32>}, {pipeline_mode = #tpu.pipeline_mode<synchronous>, transform_indices = @transform_11, window_bounds = array<i64: 1, 32>}, {pipeline_mode = #tpu.pipeline_mode<synchronous>, transform_indices = @transform_12, window_bounds = array<i64: 1, 32>}, {pipeline_mode = #tpu.pipeline_mode<synchronous>, transform_indices = @transform_13, window_bounds = array<i64: 32, 128>}, {pipeline_mode = #tpu.pipeline_mode<synchronous>, transform_indices = @transform_14, window_bounds = array<i64: 1, 128>}, {pipeline_mode = #tpu.pipeline_mode<synchronous>, transform_indices = @transform_15, window_bounds = array<i64: 128, 32>}, {pipeline_mode = #tpu.pipeline_mode<synchronous>, transform_indices = @transform_16, window_bounds = array<i64: 1, 32>}, {transform_indices = @transform_17, window_bounds = array<i64: 1, 16, 32>}]} {
    %c0_i32 = arith.constant 0 : i32
    %0 = arith.cmpi eq, %arg1, %c0_i32 : i32
    %1 = arith.extui %0 : i1 to i32
    %c0_i32_0 = arith.constant 0 : i32
    %2 = arith.cmpi ne, %1, %c0_i32_0 : i32
    scf.if %2 {
      %c0_90 = arith.constant 0 : index
      %c0_91 = arith.constant 0 : index
      %c0_92 = arith.constant 0 : index
      %165 = vector.load %arg2[%c0_90, %c0_91, %c0_92] : memref<1x16x32xf32, #tpu.memory_space<vmem>>, vector<1x16x32xf32>
      %166 = vector.shape_cast %165 : vector<1x16x32xf32> to vector<16x32xf32>
      %c0_93 = arith.constant 0 : index
      %c0_94 = arith.constant 0 : index
      %167 = vector.load %arg3[%c0_93, %c0_94] : memref<1x32xf32, #tpu.memory_space<vmem>>, vector<1x32xf32>
      %c0_95 = arith.constant 0 : index
      %c0_96 = arith.constant 0 : index
      %168 = vector.load %arg4[%c0_95, %c0_96] : memref<1x32xf32, #tpu.memory_space<vmem>>, vector<1x32xf32>
      %cst_97 = arith.constant dense<0.000000e+00> : vector<16xf32>
      %169 = vector.multi_reduction <add>, %166, %cst_97 [1] : vector<16x32xf32> to vector<16xf32>
      %170 = vector.shape_cast %169 : vector<16xf32> to vector<16x1xf32>
      %cst_98 = arith.constant 3.200000e+01 : f32
      %171 = vector.broadcast %cst_98 : f32 to vector<16x1xf32>
      %172 = arith.divf %170, %171 : vector<16x1xf32>
      %173 = vector.broadcast %172 : vector<16x1xf32> to vector<16x32xf32>
      %174 = arith.subf %166, %173 : vector<16x32xf32>
      %175 = arith.mulf %174, %174 : vector<16x32xf32>
      %cst_99 = arith.constant dense<0.000000e+00> : vector<16xf32>
      %176 = vector.multi_reduction <add>, %175, %cst_99 [1] : vector<16x32xf32> to vector<16xf32>
      %177 = vector.shape_cast %176 : vector<16xf32> to vector<16x1xf32>
      %cst_100 = arith.constant 3.200000e+01 : f32
      %178 = vector.broadcast %cst_100 : f32 to vector<16x1xf32>
      %179 = arith.divf %177, %178 : vector<16x1xf32>
      %cst_101 = arith.constant 9.99999974E-6 : f32
      %180 = vector.broadcast %cst_101 : f32 to vector<16x1xf32>
      %181 = arith.addf %179, %180 : vector<16x1xf32>
      %182 = math.rsqrt %181 : vector<16x1xf32>
      %183 = vector.broadcast %182 : vector<16x1xf32> to vector<16x32xf32>
      %184 = arith.mulf %174, %183 : vector<16x32xf32>
      %185 = vector.broadcast %167 : vector<1x32xf32> to vector<16x32xf32>
      %186 = arith.mulf %184, %185 : vector<16x32xf32>
      %187 = vector.broadcast %168 : vector<1x32xf32> to vector<16x32xf32>
      %188 = arith.addf %186, %187 : vector<16x32xf32>
      %c0_102 = arith.constant 0 : index
      %c0_103 = arith.constant 0 : index
      %189 = vector.load %arg20[%c0_102, %c0_103] : memref<16x32xf32, #tpu.memory_space<vmem>>, vector<16x32xf32>
      tpu.vector_store %arg20[%c0_102, %c0_103], %188 {strides = array<i32>} : memref<16x32xf32, #tpu.memory_space<vmem>>, vector<16x32xf32>,
      %c0_104 = arith.constant 0 : index
      %c0_105 = arith.constant 0 : index
      %190 = vector.load %arg7[%c0_104, %c0_105] : memref<32x32xf32, #tpu.memory_space<vmem>>, vector<32x32xf32>
      %cst_106 = arith.constant dense<0.000000e+00> : vector<16x32xf32>
      %191 = tpu.matmul %188, %190, %cst_106 {dimension_numbers = #tpu.dot_dimension_numbers<[1], [0], [0], [1], [0, 0, 1, 1], [], []>} : vector<16x32xf32>, vector<32x32xf32>, vector<16x32xf32> -> vector<16x32xf32>
      %c0_107 = arith.constant 0 : index
      %c0_108 = arith.constant 0 : index
      %192 = vector.load %arg8[%c0_107, %c0_108] : memref<1x32xf32, #tpu.memory_space<vmem>>, vector<1x32xf32>
      %193 = vector.broadcast %192 : vector<1x32xf32> to vector<16x32xf32>
      %194 = arith.addf %191, %193 : vector<16x32xf32>
      %c0_109 = arith.constant 0 : index
      %c0_110 = arith.constant 0 : index
      %195 = vector.load %arg21[%c0_109, %c0_110] : memref<16x32xf32, #tpu.memory_space<vmem>>, vector<16x32xf32>
      tpu.vector_store %arg21[%c0_109, %c0_110], %194 {strides = array<i32>} : memref<16x32xf32, #tpu.memory_space<vmem>>, vector<16x32xf32>,
      %c0_111 = arith.constant 0 : index
      %c0_112 = arith.constant 0 : index
      %196 = vector.load %arg9[%c0_111, %c0_112] : memref<32x32xf32, #tpu.memory_space<vmem>>, vector<32x32xf32>
      %cst_113 = arith.constant dense<0.000000e+00> : vector<16x32xf32>
      %197 = tpu.matmul %188, %196, %cst_113 {dimension_numbers = #tpu.dot_dimension_numbers<[1], [0], [0], [1], [0, 0, 1, 1], [], []>} : vector<16x32xf32>, vector<32x32xf32>, vector<16x32xf32> -> vector<16x32xf32>
      %c0_114 = arith.constant 0 : index
      %c0_115 = arith.constant 0 : index
      %198 = vector.load %arg10[%c0_114, %c0_115] : memref<1x32xf32, #tpu.memory_space<vmem>>, vector<1x32xf32>
      %199 = vector.broadcast %198 : vector<1x32xf32> to vector<16x32xf32>
      %200 = arith.addf %197, %199 : vector<16x32xf32>
      %c0_116 = arith.constant 0 : index
      %c0_117 = arith.constant 0 : index
      %201 = vector.load %arg22[%c0_116, %c0_117] : memref<16x32xf32, #tpu.memory_space<vmem>>, vector<16x32xf32>
      tpu.vector_store %arg22[%c0_116, %c0_117], %200 {strides = array<i32>} : memref<16x32xf32, #tpu.memory_space<vmem>>, vector<16x32xf32>,
    } else {
    }
    %c16_i32 = arith.constant 16 : i32
    %3 = arith.muli %arg1, %c16_i32 : i32
    %4 = tpu.assume_multiple %3, 16 : i32
    %c0 = arith.constant 0 : index
    %5 = arith.index_cast %4 : i32 to index
    %c0_1 = arith.constant 0 : index
    %6 = vector.load %arg2[%c0, %5, %c0_1] : memref<1x16x32xf32, #tpu.memory_space<vmem>>, vector<1x16x32xf32>
    %7 = vector.shape_cast %6 : vector<1x16x32xf32> to vector<16x32xf32>
    %8 = arith.index_cast %4 : i32 to index
    %c0_2 = arith.constant 0 : index
    %9 = vector.load %arg20[%8, %c0_2] : memref<16x32xf32, #tpu.memory_space<vmem>>, vector<16x32xf32>
    %c0_3 = arith.constant 0 : index
    %c0_4 = arith.constant 0 : index
    %10 = vector.load %arg5[%c0_3, %c0_4] : memref<32x32xf32, #tpu.memory_space<vmem>>, vector<32x32xf32>
    %cst = arith.constant dense<0.000000e+00> : vector<16x32xf32>
    %11 = tpu.matmul %9, %10, %cst {dimension_numbers = #tpu.dot_dimension_numbers<[1], [0], [0], [1], [0, 0, 1, 1], [], []>} : vector<16x32xf32>, vector<32x32xf32>, vector<16x32xf32> -> vector<16x32xf32>
    %c0_5 = arith.constant 0 : index
    %c0_6 = arith.constant 0 : index
    %12 = vector.load %arg6[%c0_5, %c0_6] : memref<1x32xf32, #tpu.memory_space<vmem>>, vector<1x32xf32>
    %13 = vector.broadcast %12 : vector<1x32xf32> to vector<16x32xf32>
    %14 = arith.addf %11, %13 : vector<16x32xf32>
    %cst_7 = arith.constant 0.353553385 : f32
    %15 = vector.broadcast %cst_7 : f32 to vector<16x32xf32>
    %16 = arith.mulf %14, %15 : vector<16x32xf32>
    %17 = vector.extract_strided_slice %16 {offsets = [0, 0], sizes = [16, 8], strides = [1, 1]} : vector<16x32xf32> to vector<16x8xf32>
    %c0_8 = arith.constant 0 : index
    %c0_9 = arith.constant 0 : index
    %18 = vector.load %arg21[%c0_8, %c0_9] : memref<16x32xf32, #tpu.memory_space<vmem>>, vector<16x8xf32>
    %cst_10 = arith.constant dense<0.000000e+00> : vector<16x16xf32>
    %19 = tpu.matmul %17, %18, %cst_10 {dimension_numbers = #tpu.dot_dimension_numbers<[1], [1], [0], [0], [0, 0, 1, 0], [], []>} : vector<16x8xf32>, vector<16x8xf32>, vector<16x16xf32> -> vector<16x16xf32>
    %cst_11 = arith.constant dense<0xFF800000> : vector<16xf32>
    %20 = vector.multi_reduction <maximumf>, %19, %cst_11 [1] : vector<16x16xf32> to vector<16xf32>
    %21 = vector.shape_cast %20 : vector<16xf32> to vector<16x1xf32>
    %22 = vector.broadcast %21 : vector<16x1xf32> to vector<16x16xf32>
    %23 = arith.subf %19, %22 : vector<16x16xf32>
    %24 = math.exp %23 : vector<16x16xf32>
    %cst_12 = arith.constant dense<0.000000e+00> : vector<16xf32>
    %25 = vector.multi_reduction <add>, %24, %cst_12 [1] : vector<16x16xf32> to vector<16xf32>
    %26 = vector.shape_cast %25 : vector<16xf32> to vector<16x1xf32>
    %27 = tpu.reciprocal %26 {approx = true} : vector<16x1xf32> -> vector<16x1xf32>
    %28 = vector.broadcast %27 : vector<16x1xf32> to vector<16x16xf32>
    %29 = arith.mulf %24, %28 : vector<16x16xf32>
    %c0_13 = arith.constant 0 : index
    %c0_14 = arith.constant 0 : index
    %30 = vector.load %arg22[%c0_13, %c0_14] : memref<16x32xf32, #tpu.memory_space<vmem>>, vector<16x8xf32>
    %cst_15 = arith.constant dense<0.000000e+00> : vector<16x8xf32>
    %31 = tpu.matmul %29, %30, %cst_15 {dimension_numbers = #tpu.dot_dimension_numbers<[1], [0], [0], [1], [0, 0, 1, 1], [], []>} : vector<16x16xf32>, vector<16x8xf32>, vector<16x8xf32> -> vector<16x8xf32>
    %c0_16 = arith.constant 0 : index
    %c0_17 = arith.constant 0 : index
    %32 = vector.load %arg23[%c0_16, %c0_17] : memref<16x32xf32, #tpu.memory_space<vmem>>, vector<16x8xf32>
    tpu.vector_store %arg23[%c0_16, %c0_17], %31 {strides = array<i32>} : memref<16x32xf32, #tpu.memory_space<vmem>>, vector<16x8xf32>,
    %33 = vector.extract_strided_slice %16 {offsets = [0, 8], sizes = [16, 8], strides = [1, 1]} : vector<16x32xf32> to vector<16x8xf32>
    %c0_18 = arith.constant 0 : index
    %c8 = arith.constant 8 : index
    %34 = vector.load %arg21[%c0_18, %c8] : memref<16x32xf32, #tpu.memory_space<vmem>>, vector<16x8xf32>
    %cst_19 = arith.constant dense<0.000000e+00> : vector<16x16xf32>
    %35 = tpu.matmul %33, %34, %cst_19 {dimension_numbers = #tpu.dot_dimension_numbers<[1], [1], [0], [0], [0, 0, 1, 0], [], []>} : vector<16x8xf32>, vector<16x8xf32>, vector<16x16xf32> -> vector<16x16xf32>
    %cst_20 = arith.constant dense<0xFF800000> : vector<16xf32>
    %36 = vector.multi_reduction <maximumf>, %35, %cst_20 [1] : vector<16x16xf32> to vector<16xf32>
    %37 = vector.shape_cast %36 : vector<16xf32> to vector<16x1xf32>
    %38 = vector.broadcast %37 : vector<16x1xf32> to vector<16x16xf32>
    %39 = arith.subf %35, %38 : vector<16x16xf32>
    %40 = math.exp %39 : vector<16x16xf32>
    %cst_21 = arith.constant dense<0.000000e+00> : vector<16xf32>
    %41 = vector.multi_reduction <add>, %40, %cst_21 [1] : vector<16x16xf32> to vector<16xf32>
    %42 = vector.shape_cast %41 : vector<16xf32> to vector<16x1xf32>
    %43 = tpu.reciprocal %42 {approx = true} : vector<16x1xf32> -> vector<16x1xf32>
    %44 = vector.broadcast %43 : vector<16x1xf32> to vector<16x16xf32>
    %45 = arith.mulf %40, %44 : vector<16x16xf32>
    %c0_22 = arith.constant 0 : index
    %c8_23 = arith.constant 8 : index
    %46 = vector.load %arg22[%c0_22, %c8_23] : memref<16x32xf32, #tpu.memory_space<vmem>>, vector<16x8xf32>
    %cst_24 = arith.constant dense<0.000000e+00> : vector<16x8xf32>
    %47 = tpu.matmul %45, %46, %cst_24 {dimension_numbers = #tpu.dot_dimension_numbers<[1], [0], [0], [1], [0, 0, 1, 1], [], []>} : vector<16x16xf32>, vector<16x8xf32>, vector<16x8xf32> -> vector<16x8xf32>
    %c0_25 = arith.constant 0 : index
    %c8_26 = arith.constant 8 : index
    %48 = vector.load %arg23[%c0_25, %c8_26] : memref<16x32xf32, #tpu.memory_space<vmem>>, vector<16x8xf32>
    tpu.vector_store %arg23[%c0_25, %c8_26], %47 {strides = array<i32>} : memref<16x32xf32, #tpu.memory_space<vmem>>, vector<16x8xf32>,
    %49 = vector.extract_strided_slice %16 {offsets = [0, 16], sizes = [16, 8], strides = [1, 1]} : vector<16x32xf32> to vector<16x8xf32>
    %c0_27 = arith.constant 0 : index
    %c16 = arith.constant 16 : index
    %50 = vector.load %arg21[%c0_27, %c16] : memref<16x32xf32, #tpu.memory_space<vmem>>, vector<16x8xf32>
    %cst_28 = arith.constant dense<0.000000e+00> : vector<16x16xf32>
    %51 = tpu.matmul %49, %50, %cst_28 {dimension_numbers = #tpu.dot_dimension_numbers<[1], [1], [0], [0], [0, 0, 1, 0], [], []>} : vector<16x8xf32>, vector<16x8xf32>, vector<16x16xf32> -> vector<16x16xf32>
    %cst_29 = arith.constant dense<0xFF800000> : vector<16xf32>
    %52 = vector.multi_reduction <maximumf>, %51, %cst_29 [1] : vector<16x16xf32> to vector<16xf32>
    %53 = vector.shape_cast %52 : vector<16xf32> to vector<16x1xf32>
    %54 = vector.broadcast %53 : vector<16x1xf32> to vector<16x16xf32>
    %55 = arith.subf %51, %54 : vector<16x16xf32>
    %56 = math.exp %55 : vector<16x16xf32>
    %cst_30 = arith.constant dense<0.000000e+00> : vector<16xf32>
    %57 = vector.multi_reduction <add>, %56, %cst_30 [1] : vector<16x16xf32> to vector<16xf32>
    %58 = vector.shape_cast %57 : vector<16xf32> to vector<16x1xf32>
    %59 = tpu.reciprocal %58 {approx = true} : vector<16x1xf32> -> vector<16x1xf32>
    %60 = vector.broadcast %59 : vector<16x1xf32> to vector<16x16xf32>
    %61 = arith.mulf %56, %60 : vector<16x16xf32>
    %c0_31 = arith.constant 0 : index
    %c16_32 = arith.constant 16 : index
    %62 = vector.load %arg22[%c0_31, %c16_32] : memref<16x32xf32, #tpu.memory_space<vmem>>, vector<16x8xf32>
    %cst_33 = arith.constant dense<0.000000e+00> : vector<16x8xf32>
    %63 = tpu.matmul %61, %62, %cst_33 {dimension_numbers = #tpu.dot_dimension_numbers<[1], [0], [0], [1], [0, 0, 1, 1], [], []>} : vector<16x16xf32>, vector<16x8xf32>, vector<16x8xf32> -> vector<16x8xf32>
    %c0_34 = arith.constant 0 : index
    %c16_35 = arith.constant 16 : index
    %64 = vector.load %arg23[%c0_34, %c16_35] : memref<16x32xf32, #tpu.memory_space<vmem>>, vector<16x8xf32>
    tpu.vector_store %arg23[%c0_34, %c16_35], %63 {strides = array<i32>} : memref<16x32xf32, #tpu.memory_space<vmem>>, vector<16x8xf32>,
    %65 = vector.extract_strided_slice %16 {offsets = [0, 24], sizes = [16, 8], strides = [1, 1]} : vector<16x32xf32> to vector<16x8xf32>
    %c0_36 = arith.constant 0 : index
    %c24 = arith.constant 24 : index
    %66 = vector.load %arg21[%c0_36, %c24] : memref<16x32xf32, #tpu.memory_space<vmem>>, vector<16x8xf32>
    %cst_37 = arith.constant dense<0.000000e+00> : vector<16x16xf32>
    %67 = tpu.matmul %65, %66, %cst_37 {dimension_numbers = #tpu.dot_dimension_numbers<[1], [1], [0], [0], [0, 0, 1, 0], [], []>} : vector<16x8xf32>, vector<16x8xf32>, vector<16x16xf32> -> vector<16x16xf32>
    %cst_38 = arith.constant dense<0xFF800000> : vector<16xf32>
    %68 = vector.multi_reduction <maximumf>, %67, %cst_38 [1] : vector<16x16xf32> to vector<16xf32>
    %69 = vector.shape_cast %68 : vector<16xf32> to vector<16x1xf32>
    %70 = vector.broadcast %69 : vector<16x1xf32> to vector<16x16xf32>
    %71 = arith.subf %67, %70 : vector<16x16xf32>
    %72 = math.exp %71 : vector<16x16xf32>
    %cst_39 = arith.constant dense<0.000000e+00> : vector<16xf32>
    %73 = vector.multi_reduction <add>, %72, %cst_39 [1] : vector<16x16xf32> to vector<16xf32>
    %74 = vector.shape_cast %73 : vector<16xf32> to vector<16x1xf32>
    %75 = tpu.reciprocal %74 {approx = true} : vector<16x1xf32> -> vector<16x1xf32>
    %76 = vector.broadcast %75 : vector<16x1xf32> to vector<16x16xf32>
    %77 = arith.mulf %72, %76 : vector<16x16xf32>
    %c0_40 = arith.constant 0 : index
    %c24_41 = arith.constant 24 : index
    %78 = vector.load %arg22[%c0_40, %c24_41] : memref<16x32xf32, #tpu.memory_space<vmem>>, vector<16x8xf32>
    %cst_42 = arith.constant dense<0.000000e+00> : vector<16x8xf32>
    %79 = tpu.matmul %77, %78, %cst_42 {dimension_numbers = #tpu.dot_dimension_numbers<[1], [0], [0], [1], [0, 0, 1, 1], [], []>} : vector<16x16xf32>, vector<16x8xf32>, vector<16x8xf32> -> vector<16x8xf32>
    %c0_43 = arith.constant 0 : index
    %c24_44 = arith.constant 24 : index
    %80 = vector.load %arg23[%c0_43, %c24_44] : memref<16x32xf32, #tpu.memory_space<vmem>>, vector<16x8xf32>
    tpu.vector_store %arg23[%c0_43, %c24_44], %79 {strides = array<i32>} : memref<16x32xf32, #tpu.memory_space<vmem>>, vector<16x8xf32>,
    %c0_45 = arith.constant 0 : index
    %c0_46 = arith.constant 0 : index
    %81 = vector.load %arg23[%c0_45, %c0_46] : memref<16x32xf32, #tpu.memory_space<vmem>>, vector<16x32xf32>
    %c0_47 = arith.constant 0 : index
    %c0_48 = arith.constant 0 : index
    %82 = vector.load %arg11[%c0_47, %c0_48] : memref<32x32xf32, #tpu.memory_space<vmem>>, vector<32x32xf32>
    %cst_49 = arith.constant dense<0.000000e+00> : vector<16x32xf32>
    %83 = tpu.matmul %81, %82, %cst_49 {dimension_numbers = #tpu.dot_dimension_numbers<[1], [0], [0], [1], [0, 0, 1, 1], [], []>} : vector<16x32xf32>, vector<32x32xf32>, vector<16x32xf32> -> vector<16x32xf32>
    %c0_50 = arith.constant 0 : index
    %c0_51 = arith.constant 0 : index
    %84 = vector.load %arg12[%c0_50, %c0_51] : memref<1x32xf32, #tpu.memory_space<vmem>>, vector<1x32xf32>
    %85 = vector.broadcast %84 : vector<1x32xf32> to vector<16x32xf32>
    %86 = arith.addf %83, %85 : vector<16x32xf32>
    %87 = arith.addf %7, %86 : vector<16x32xf32>
    %c0_52 = arith.constant 0 : index
    %c0_53 = arith.constant 0 : index
    %88 = vector.load %arg13[%c0_52, %c0_53] : memref<1x32xf32, #tpu.memory_space<vmem>>, vector<1x32xf32>
    %c0_54 = arith.constant 0 : index
    %c0_55 = arith.constant 0 : index
    %89 = vector.load %arg14[%c0_54, %c0_55] : memref<1x32xf32, #tpu.memory_space<vmem>>, vector<1x32xf32>
    %cst_56 = arith.constant dense<0.000000e+00> : vector<16xf32>
    %90 = vector.multi_reduction <add>, %87, %cst_56 [1] : vector<16x32xf32> to vector<16xf32>
    %91 = vector.shape_cast %90 : vector<16xf32> to vector<16x1xf32>
    %cst_57 = arith.constant 3.200000e+01 : f32
    %92 = vector.broadcast %cst_57 : f32 to vector<16x1xf32>
    %93 = arith.divf %91, %92 : vector<16x1xf32>
    %94 = vector.broadcast %93 : vector<16x1xf32> to vector<16x32xf32>
    %95 = arith.subf %87, %94 : vector<16x32xf32>
    %96 = arith.mulf %95, %95 : vector<16x32xf32>
    %cst_58 = arith.constant dense<0.000000e+00> : vector<16xf32>
    %97 = vector.multi_reduction <add>, %96, %cst_58 [1] : vector<16x32xf32> to vector<16xf32>
    %98 = vector.shape_cast %97 : vector<16xf32> to vector<16x1xf32>
    %cst_59 = arith.constant 3.200000e+01 : f32
    %99 = vector.broadcast %cst_59 : f32 to vector<16x1xf32>
    %100 = arith.divf %98, %99 : vector<16x1xf32>
    %cst_60 = arith.constant 9.99999974E-6 : f32
    %101 = vector.broadcast %cst_60 : f32 to vector<16x1xf32>
    %102 = arith.addf %100, %101 : vector<16x1xf32>
    %103 = math.rsqrt %102 : vector<16x1xf32>
    %104 = vector.broadcast %103 : vector<16x1xf32> to vector<16x32xf32>
    %105 = arith.mulf %95, %104 : vector<16x32xf32>
    %106 = vector.broadcast %88 : vector<1x32xf32> to vector<16x32xf32>
    %107 = arith.mulf %105, %106 : vector<16x32xf32>
    %108 = vector.broadcast %89 : vector<1x32xf32> to vector<16x32xf32>
    %109 = arith.addf %107, %108 : vector<16x32xf32>
    %c0_61 = arith.constant 0 : index
    %c0_62 = arith.constant 0 : index
    %110 = vector.load %arg15[%c0_61, %c0_62] : memref<32x128xf32, #tpu.memory_space<vmem>>, vector<32x128xf32>
    %cst_63 = arith.constant dense<0.000000e+00> : vector<16x128xf32>
    %111 = tpu.matmul %109, %110, %cst_63 {dimension_numbers = #tpu.dot_dimension_numbers<[1], [0], [0], [1], [0, 0, 1, 1], [], []>} : vector<16x32xf32>, vector<32x128xf32>, vector<16x128xf32> -> vector<16x128xf32>
    %c0_64 = arith.constant 0 : index
    %c0_65 = arith.constant 0 : index
    %112 = vector.load %arg16[%c0_64, %c0_65] : memref<1x128xf32, #tpu.memory_space<vmem>>, vector<1x128xf32>
    %113 = vector.broadcast %112 : vector<1x128xf32> to vector<16x128xf32>
    %114 = arith.addf %111, %113 : vector<16x128xf32>
    %cst_66 = arith.constant 5.000000e-01 : f32
    %115 = vector.broadcast %cst_66 : f32 to vector<16x128xf32>
    %116 = arith.mulf %115, %114 : vector<16x128xf32>
    %cst_67 = arith.constant 0.707106769 : f32
    %117 = vector.broadcast %cst_67 : f32 to vector<16x128xf32>
    %118 = arith.mulf %114, %117 : vector<16x128xf32>
    %cst_68 = arith.constant 0.000000e+00 : f32
    %119 = vector.broadcast %cst_68 : f32 to vector<16x128xf32>
    %120 = arith.cmpf oge, %118, %119 : vector<16x128xf32>
    %cst_69 = arith.constant 1.000000e+00 : f32
    %cst_70 = arith.constant -1.000000e+00 : f32
    %121 = vector.broadcast %cst_69 : f32 to vector<16x128xf32>
    %122 = vector.broadcast %cst_70 : f32 to vector<16x128xf32>
    %123 = arith.select %120, %121, %122 : vector<16x128xi1>, vector<16x128xf32>
    %124 = math.absf %118 : vector<16x128xf32>
    %cst_71 = arith.constant 0.327591091 : f32
    %125 = vector.broadcast %cst_71 : f32 to vector<16x128xf32>
    %126 = arith.mulf %125, %124 : vector<16x128xf32>
    %cst_72 = arith.constant 1.000000e+00 : f32
    %127 = vector.broadcast %cst_72 : f32 to vector<16x128xf32>
    %128 = arith.addf %127, %126 : vector<16x128xf32>
    %cst_73 = arith.constant 1.000000e+00 : f32
    %129 = vector.broadcast %cst_73 : f32 to vector<16x128xf32>
    %130 = arith.divf %129, %128 : vector<16x128xf32>
    %cst_74 = arith.constant 1.06140542 : f32
    %131 = vector.broadcast %cst_74 : f32 to vector<16x128xf32>
    %132 = arith.mulf %131, %130 : vector<16x128xf32>
    %cst_75 = arith.constant -1.45315206 : f32
    %133 = vector.broadcast %cst_75 : f32 to vector<16x128xf32>
    %134 = arith.addf %132, %133 : vector<16x128xf32>
    %135 = arith.mulf %134, %130 : vector<16x128xf32>
    %cst_76 = arith.constant 1.42141378 : f32
    %136 = vector.broadcast %cst_76 : f32 to vector<16x128xf32>
    %137 = arith.addf %135, %136 : vector<16x128xf32>
    %138 = arith.mulf %137, %130 : vector<16x128xf32>
    %cst_77 = arith.constant -0.284496725 : f32
    %139 = vector.broadcast %cst_77 : f32 to vector<16x128xf32>
    %140 = arith.addf %138, %139 : vector<16x128xf32>
    %141 = arith.mulf %140, %130 : vector<16x128xf32>
    %cst_78 = arith.constant 0.254829586 : f32
    %142 = vector.broadcast %cst_78 : f32 to vector<16x128xf32>
    %143 = arith.addf %141, %142 : vector<16x128xf32>
    %144 = arith.mulf %143, %130 : vector<16x128xf32>
    %cst_79 = arith.constant 0.000000e+00 : f32
    %145 = vector.broadcast %cst_79 : f32 to vector<16x128xf32>
    %146 = arith.subf %145, %124 : vector<16x128xf32>
    %147 = arith.mulf %146, %124 : vector<16x128xf32>
    %148 = math.exp %147 : vector<16x128xf32>
    %149 = arith.mulf %144, %148 : vector<16x128xf32>
    %cst_80 = arith.constant 1.000000e+00 : f32
    %150 = vector.broadcast %cst_80 : f32 to vector<16x128xf32>
    %151 = arith.subf %150, %149 : vector<16x128xf32>
    %152 = arith.mulf %123, %151 : vector<16x128xf32>
    %cst_81 = arith.constant 1.000000e+00 : f32
    %153 = vector.broadcast %cst_81 : f32 to vector<16x128xf32>
    %154 = arith.addf %153, %152 : vector<16x128xf32>
    %155 = arith.mulf %116, %154 : vector<16x128xf32>
    %c0_82 = arith.constant 0 : index
    %c0_83 = arith.constant 0 : index
    %156 = vector.load %arg17[%c0_82, %c0_83] : memref<128x32xf32, #tpu.memory_space<vmem>>, vector<128x32xf32>
    %cst_84 = arith.constant dense<0.000000e+00> : vector<16x32xf32>
    %157 = tpu.matmul %155, %156, %cst_84 {dimension_numbers = #tpu.dot_dimension_numbers<[1], [0], [0], [1], [0, 0, 1, 1], [], []>} : vector<16x128xf32>, vector<128x32xf32>, vector<16x32xf32> -> vector<16x32xf32>
    %c0_85 = arith.constant 0 : index
    %c0_86 = arith.constant 0 : index
    %158 = vector.load %arg18[%c0_85, %c0_86] : memref<1x32xf32, #tpu.memory_space<vmem>>, vector<1x32xf32>
    %159 = vector.broadcast %158 : vector<1x32xf32> to vector<16x32xf32>
    %160 = arith.addf %157, %159 : vector<16x32xf32>
    %161 = arith.addf %87, %160 : vector<16x32xf32>
    %c0_87 = arith.constant 0 : index
    %c0_88 = arith.constant 0 : index
    %c0_89 = arith.constant 0 : index
    %162 = vector.load %arg19[%c0_87, %c0_88, %c0_89] : memref<1x16x32xf32, #tpu.memory_space<vmem>>, vector<1x16x32xf32>
    %163 = vector.shape_cast %162 : vector<1x16x32xf32> to vector<16x32xf32>
    %164 = vector.shape_cast %161 : vector<16x32xf32> to vector<1x16x32xf32>
    tpu.vector_store %arg19[%c0_87, %c0_88, %c0_89], %164 {strides = array<i32>} : memref<1x16x32xf32, #tpu.memory_space<vmem>>, vector<1x16x32xf32>,
    return
  }
  func.func @transform_0(%arg0: i32, %arg1: i32) -> (i32, i32, i32) {
    %c0_i32 = arith.constant 0 : i32
    %c0_i32_0 = arith.constant 0 : i32
    %c0_i32_1 = arith.constant 0 : i32
    return %arg0, %c0_i32, %c0_i32_0 : i32, i32, i32
  }
  func.func @transform_1(%arg0: i32, %arg1: i32) -> (i32, i32) {
    %c0_i32 = arith.constant 0 : i32
    %c0_i32_0 = arith.constant 0 : i32
    %c0_i32_1 = arith.constant 0 : i32
    return %c0_i32, %c0_i32_0 : i32, i32
  }
  func.func @transform_2(%arg0: i32, %arg1: i32) -> (i32, i32) {
    %c0_i32 = arith.constant 0 : i32
    %c0_i32_0 = arith.constant 0 : i32
    %c0_i32_1 = arith.constant 0 : i32
    return %c0_i32, %c0_i32_0 : i32, i32
  }
  func.func @transform_3(%arg0: i32, %arg1: i32) -> (i32, i32) {
    %c0_i32 = arith.constant 0 : i32
    %c0_i32_0 = arith.constant 0 : i32
    %c0_i32_1 = arith.constant 0 : i32
    return %c0_i32, %c0_i32_0 : i32, i32
  }
  func.func @transform_4(%arg0: i32, %arg1: i32) -> (i32, i32) {
    %c0_i32 = arith.constant 0 : i32
    %c0_i32_0 = arith.constant 0 : i32
    %c0_i32_1 = arith.constant 0 : i32
    return %c0_i32, %c0_i32_0 : i32, i32
  }
  func.func @transform_5(%arg0: i32, %arg1: i32) -> (i32, i32) {
    %c0_i32 = arith.constant 0 : i32
    %c0_i32_0 = arith.constant 0 : i32
    %c0_i32_1 = arith.constant 0 : i32
    return %c0_i32, %c0_i32_0 : i32, i32
  }
  func.func @transform_6(%arg0: i32, %arg1: i32) -> (i32, i32) {
    %c0_i32 = arith.constant 0 : i32
    %c0_i32_0 = arith.constant 0 : i32
    %c0_i32_1 = arith.constant 0 : i32
    return %c0_i32, %c0_i32_0 : i32, i32
  }
  func.func @transform_7(%arg0: i32, %arg1: i32) -> (i32, i32) {
    %c0_i32 = arith.constant 0 : i32
    %c0_i32_0 = arith.constant 0 : i32
    %c0_i32_1 = arith.constant 0 : i32
    return %c0_i32, %c0_i32_0 : i32, i32
  }
  func.func @transform_8(%arg0: i32, %arg1: i32) -> (i32, i32) {
    %c0_i32 = arith.constant 0 : i32
    %c0_i32_0 = arith.constant 0 : i32
    %c0_i32_1 = arith.constant 0 : i32
    return %c0_i32, %c0_i32_0 : i32, i32
  }
  func.func @transform_9(%arg0: i32, %arg1: i32) -> (i32, i32) {
    %c0_i32 = arith.constant 0 : i32
    %c0_i32_0 = arith.constant 0 : i32
    %c0_i32_1 = arith.constant 0 : i32
    return %c0_i32, %c0_i32_0 : i32, i32
  }
  func.func @transform_10(%arg0: i32, %arg1: i32) -> (i32, i32) {
    %c0_i32 = arith.constant 0 : i32
    %c0_i32_0 = arith.constant 0 : i32
    %c0_i32_1 = arith.constant 0 : i32
    return %c0_i32, %c0_i32_0 : i32, i32
  }
  func.func @transform_11(%arg0: i32, %arg1: i32) -> (i32, i32) {
    %c0_i32 = arith.constant 0 : i32
    %c0_i32_0 = arith.constant 0 : i32
    %c0_i32_1 = arith.constant 0 : i32
    return %c0_i32, %c0_i32_0 : i32, i32
  }
  func.func @transform_12(%arg0: i32, %arg1: i32) -> (i32, i32) {
    %c0_i32 = arith.constant 0 : i32
    %c0_i32_0 = arith.constant 0 : i32
    %c0_i32_1 = arith.constant 0 : i32
    return %c0_i32, %c0_i32_0 : i32, i32
  }
  func.func @transform_13(%arg0: i32, %arg1: i32) -> (i32, i32) {
    %c0_i32 = arith.constant 0 : i32
    %c0_i32_0 = arith.constant 0 : i32
    %c0_i32_1 = arith.constant 0 : i32
    return %c0_i32, %c0_i32_0 : i32, i32
  }
  func.func @transform_14(%arg0: i32, %arg1: i32) -> (i32, i32) {
    %c0_i32 = arith.constant 0 : i32
    %c0_i32_0 = arith.constant 0 : i32
    %c0_i32_1 = arith.constant 0 : i32
    return %c0_i32, %c0_i32_0 : i32, i32
  }
  func.func @transform_15(%arg0: i32, %arg1: i32) -> (i32, i32) {
    %c0_i32 = arith.constant 0 : i32
    %c0_i32_0 = arith.constant 0 : i32
    %c0_i32_1 = arith.constant 0 : i32
    return %c0_i32, %c0_i32_0 : i32, i32
  }
  func.func @transform_16(%arg0: i32, %arg1: i32) -> (i32, i32) {
    %c0_i32 = arith.constant 0 : i32
    %c0_i32_0 = arith.constant 0 : i32
    %c0_i32_1 = arith.constant 0 : i32
    return %c0_i32, %c0_i32_0 : i32, i32
  }
  func.func @transform_17(%arg0: i32, %arg1: i32) -> (i32, i32, i32) {
    %c0_i32 = arith.constant 0 : i32
    %c0_i32_0 = arith.constant 0 : i32
    return %arg0, %arg1, %c0_i32 : i32, i32, i32
  }
}

</mosaic_0001>

<llo_original>
// kernel: tpu_custom_call.1
$region0: #{tpu_custom_call.1}
  #allocation0 [shape = 'u32[]', space=smem, size = 0x4, offset = 0x4, fixed_abs, tag = 'smem constant byte address 0x4 - core index']
  #allocation1 [shape = 'u32[144,128]{1,0:T(1,128)}', space=vmem, size = 0x12000, scoped, tag = 'internal scratch']
  #allocation2 [shape = 'f32[16,32]{1,0:T(8,128)}', space=vmem, size = 0x2000, scoped, tag = 'scratch operand']
  #allocation3 [shape = 'f32[16,32]{1,0:T(8,128)}', space=vmem, size = 0x2000, scoped, tag = 'scratch operand']
  #allocation4 [shape = 'f32[16,32]{1,0:T(8,128)}', space=vmem, size = 0x2000, scoped, tag = 'scratch operand']
  #allocation5 [shape = 'f32[16,32]{1,0:T(8,128)}', space=vmem, size = 0x2000, scoped, tag = 'scratch operand']
  %s0 = inlined_call_operand.vmem [shape: f32[2,16,32], index: 0, kind: input, shape index: {}]
  %s1 = inlined_call_operand.vmem [shape: f32[1,32], index: 1, kind: input, shape index: {}]
  %s2 = inlined_call_operand.vmem [shape: f32[1,32], index: 2, kind: input, shape index: {}]
  %s3 = inlined_call_operand.vmem [shape: f32[32,32], index: 3, kind: input, shape index: {}]
  %s4 = inlined_call_operand.vmem [shape: f32[1,32], index: 4, kind: input, shape index: {}]
  %s5 = inlined_call_operand.vmem [shape: f32[32,32], index: 5, kind: input, shape index: {}]
  %s6 = inlined_call_operand.vmem [shape: f32[1,32], index: 6, kind: input, shape index: {}]
  %s7 = inlined_call_operand.vmem [shape: f32[32,32], index: 7, kind: input, shape index: {}]
  %s8 = inlined_call_operand.vmem [shape: f32[1,32], index: 8, kind: input, shape index: {}]
  %s9 = inlined_call_operand.vmem [shape: f32[32,32], index: 9, kind: input, shape index: {}]
  %s10 = inlined_call_operand.vmem [shape: f32[1,32], index: 10, kind: input, shape index: {}]
  %s11 = inlined_call_operand.vmem [shape: f32[1,32], index: 11, kind: input, shape index: {}]
  %s12 = inlined_call_operand.vmem [shape: f32[1,32], index: 12, kind: input, shape index: {}]
  %s13 = inlined_call_operand.hbm [shape: f32[32,128], index: 13, kind: input, shape index: {}]
  %s14 = inlined_call_operand.vmem [shape: f32[1,128], index: 14, kind: input, shape index: {}]
  %s15 = inlined_call_operand.vmem [shape: f32[128,32], index: 15, kind: input, shape index: {}]
  %s16 = inlined_call_operand.vmem [shape: f32[1,32], index: 16, kind: input, shape index: {}]
  %s17 = inlined_call_operand.hbm [shape: f32[2,16,32], index: 17, kind: output, shape index: {}]
  %s18 = sld [smem:[#allocation0]]
  $region109: #{tpu_custom_call.1} parent=0
    _
  %s20 = ssub.s32 1, %s18
  %s21 = scalar_select 0, %s20, %s18
  $region1: #{tpu_custom_call.1} parent=0
    #allocation6 [shape = 'u8[16384]{0}', space=vmem, size = 0x4000, scoped, tag = 'input window, operand 13, single buffered']
    #allocation7 [shape = 's32[2]{0}', space=sflag, size = 0x8, scoped, tag = 'scoped memory for tpu_custom_call.1']
    #allocation8 [shape = 's32[2]{0}', space=sflag, size = 0x8, scoped, tag = 'scoped memory for tpu_custom_call.1']
    #allocation9 [shape = 'u8[16384]{0}', space=vmem, size = 0x4000, scoped, tag = 'output window, operand 0']
    %22 = vsyncpa [#allocation7], 0
    %23 = vsyncpa [#allocation8], 0
    %s24 = scalar_lea.sflag [#allocation8], 1
    %25 = vsyncpa %s24, 0
    loop: start=0, step=1, limit=4
    $region2: #{tpu_custom_call.1} parent=1 // loop_pre_header
      _
    $region3: #{tpu_custom_call.1} parent=1 // loop_header
      %s27 = sphi 0, %s31
      %p28 = scmp.ge.s32.totalorder %s27, 4
      %s34 = sphi 0, %s46
      %s35 = sphi 0, %s42
      %s36 = sphi 0, %s34
      %s37 = sphi 0, %s35
      %s38 = sphi 0, %s36
      %s39 = sphi 0, %s37
      %s49 = sphi 0, %s51
      %s52 = sphi 0, %s49
      %s53 = sphi 0, %s52
      %s69 = sphi 0, %s53
      %s73 = sphi 0, %s73
      %s75 = sphi 0, %s73
      %s76 = sphi 0, %s75
      %s90 = sphi 0, %s76
      %s94 = sphi 0, %s94
      %s96 = sphi 0, %s94
      %s97 = sphi 0, %s96
      %s111 = sphi 0, %s97
      %s115 = sphi 0, %s115
      %s117 = sphi 0, %s115
      %s118 = sphi 0, %s117
      %s132 = sphi 0, %s118
      %s136 = sphi 0, %s136
      %s138 = sphi 0, %s136
      %s139 = sphi 0, %s138
      %s153 = sphi 0, %s139
      %s157 = sphi 0, %s157
      %s159 = sphi 0, %s157
      %s160 = sphi 0, %s159
      %s174 = sphi 0, %s160
      %s178 = sphi 0, %s178
      %s180 = sphi 0, %s178
      %s181 = sphi 0, %s180
      %s195 = sphi 0, %s181
      %s199 = sphi 0, %s199
      %s201 = sphi 0, %s199
      %s202 = sphi 0, %s201
      %s216 = sphi 0, %s202
      %s220 = sphi 0, %s220
      %s222 = sphi 0, %s220
      %s223 = sphi 0, %s222
      %s237 = sphi 0, %s223
      %s241 = sphi 0, %s241
      %s243 = sphi 0, %s241
      %s244 = sphi 0, %s243
      %s258 = sphi 0, %s244
      %s262 = sphi 0, %s262
      %s264 = sphi 0, %s262
      %s265 = sphi 0, %s264
      %s279 = sphi 0, %s265
      %s283 = sphi 0, %s283
      %s285 = sphi 0, %s283
      %s286 = sphi 0, %s285
      %s300 = sphi 0, %s286
      %s304 = sphi 0, %s304
      %s306 = sphi 0, %s304
      %s307 = sphi 0, %s306
      %s321 = sphi 0, %s307
      %s325 = sphi 0, %s325
      %s327 = sphi 0, %s325
      %s328 = sphi 0, %s327
      %s342 = sphi 0, %s328
      %s346 = sphi 0, %s346
      %s348 = sphi 0, %s346
      %s349 = sphi 0, %s348
      %s363 = sphi 0, %s349
      %s367 = sphi 0, %s367
      %s369 = sphi 0, %s367
      %s370 = sphi 0, %s369
      %s384 = sphi 0, %s370
      %s388 = sphi 0, %s388
      %s390 = sphi 0, %s388
      %s391 = sphi 0, %s390
      %s405 = sphi 0, %s391
      %s413 = sphi 0, %s415
      %s416 = sphi 0, %s413
      %s417 = sphi 0, %s416
      %s433 = sphi 0, %s417
    $region4: #{tpu_custom_call.1} parent=1 // loop_header_branch
      %30 = sbr.rel (%p28) target = $region8
    $region5: #{tpu_custom_call.1} parent=1 // loop_body
      %s32 = ssub.s32 %s27, 1
      %s33 = ssub.s32 %s27, 2
      %s40 = sadd.s32 1, %s35
      %p41 = scmp.ge.s32.totalorder %s40, 1
      %s42 = scalar_select %p41, 0, %s40
      %s43 = sadd.s32 1, %s34
      %s44 = scalar_select %p41, %s43, %s34
      %p45 = scmp.ge.s32.totalorder %s44, 2
      %s46 = scalar_select %p45, 0, %s44
      %s47 = ssub.s32 %s34, %s46
      %p48 = scmp.eq.s32.totalorder %s47, 0
      %s50 = sadd.s32 %s49, 1
      %s51 = scalar_select %p48, %s49, %s50
      %p54 = pneg %p48
      %p55 = scmp.eq.s32.totalorder %s27, 1
      %p56 = por %p54, %p55
      %p57 = scmp.ne.s32.totalorder %s49, %s52
      %p58 = scmp.eq.s32.totalorder %s27, 0
      %p59 = por %p57, %p58
      %p60 = scmp.ne.s32.totalorder %s49, %s52
      %p61 = scmp.eq.s32.totalorder %s32, 1
      %p62 = por %p60, %p61
      %p63 = scmp.ne.s32.totalorder %s52, %s53
      %p64 = scmp.eq.s32.totalorder %s32, 0
      %p65 = por %p63, %p64
      %p66 = scmp.ne.s32.totalorder %s52, %s53
      %p67 = scmp.eq.s32.totalorder %s33, 1
      %p68 = por %p66, %p67
      %p70 = scmp.ne.s32.totalorder %s53, %s69
      %p71 = scmp.eq.s32.totalorder %s33, 0
      %p72 = por %p70, %p71
      %s74 = sadd.s32 %s73, 1
      %p77 = scmp.eq.s32.totalorder %s27, 1
      %p78 = scmp.ne.s32.totalorder %s73, %s75
      %p79 = scmp.eq.s32.totalorder %s27, 0
      %p80 = por %p78, %p79
      %p81 = scmp.ne.s32.totalorder %s73, %s75
      %p82 = scmp.eq.s32.totalorder %s32, 1
      %p83 = por %p81, %p82
      %p84 = scmp.ne.s32.totalorder %s75, %s76
      %p85 = scmp.eq.s32.totalorder %s32, 0
      %p86 = por %p84, %p85
      %p87 = scmp.ne.s32.totalorder %s75, %s76
      %p88 = scmp.eq.s32.totalorder %s33, 1
      %p89 = por %p87, %p88
      %p91 = scmp.ne.s32.totalorder %s76, %s90
      %p92 = scmp.eq.s32.totalorder %s33, 0
      %p93 = por %p91, %p92
      %s95 = sadd.s32 %s94, 1
      %p98 = scmp.eq.s32.totalorder %s27, 1
      %p99 = scmp.ne.s32.totalorder %s94, %s96
      %p100 = scmp.eq.s32.totalorder %s27, 0
      %p101 = por %p99, %p100
      %p102 = scmp.ne.s32.totalorder %s94, %s96
      %p103 = scmp.eq.s32.totalorder %s32, 1
      %p104 = por %p102, %p103
      %p105 = scmp.ne.s32.totalorder %s96, %s97
      %p106 = scmp.eq.s32.totalorder %s32, 0
      %p107 = por %p105, %p106
      %p108 = scmp.ne.s32.totalorder %s96, %s97
      %p109 = scmp.eq.s32.totalorder %s33, 1
      %p110 = por %p108, %p109
      %p112 = scmp.ne.s32.totalorder %s97, %s111
      %p113 = scmp.eq.s32.totalorder %s33, 0
      %p114 = por %p112, %p113
      %s116 = sadd.s32 %s115, 1
      %p119 = scmp.eq.s32.totalorder %s27, 1
      %p120 = scmp.ne.s32.totalorder %s115, %s117
      %p121 = scmp.eq.s32.totalorder %s27, 0
      %p122 = por %p120, %p121
      %p123 = scmp.ne.s32.totalorder %s115, %s117
      %p124 = scmp.eq.s32.totalorder %s32, 1
      %p125 = por %p123, %p124
      %p126 = scmp.ne.s32.totalorder %s117, %s118
      %p127 = scmp.eq.s32.totalorder %s32, 0
      %p128 = por %p126, %p127
      %p129 = scmp.ne.s32.totalorder %s117, %s118
      %p130 = scmp.eq.s32.totalorder %s33, 1
      %p131 = por %p129, %p130
      %p133 = scmp.ne.s32.totalorder %s118, %s132
      %p134 = scmp.eq.s32.totalorder %s33, 0
      %p135 = por %p133, %p134
      %s137 = sadd.s32 %s136, 1
      %p140 = scmp.eq.s32.totalorder %s27, 1
      %p141 = scmp.ne.s32.totalorder %s136, %s138
      %p142 = scmp.eq.s32.totalorder %s27, 0
      %p143 = por %p141, %p142
      %p144 = scmp.ne.s32.totalorder %s136, %s138
      %p145 = scmp.eq.s32.totalorder %s32, 1
      %p146 = por %p144, %p145
      %p147 = scmp.ne.s32.totalorder %s138, %s139
      %p148 = scmp.eq.s32.totalorder %s32, 0
      %p149 = por %p147, %p148
      %p150 = scmp.ne.s32.totalorder %s138, %s139
      %p151 = scmp.eq.s32.totalorder %s33, 1
      %p152 = por %p150, %p151
      %p154 = scmp.ne.s32.totalorder %s139, %s153
      %p155 = scmp.eq.s32.totalorder %s33, 0
      %p156 = por %p154, %p155
      %s158 = sadd.s32 %s157, 1
      %p161 = scmp.eq.s32.totalorder %s27, 1
      %p162 = scmp.ne.s32.totalorder %s157, %s159
      %p163 = scmp.eq.s32.totalorder %s27, 0
      %p164 = por %p162, %p163
      %p165 = scmp.ne.s32.totalorder %s157, %s159
      %p166 = scmp.eq.s32.totalorder %s32, 1
      %p167 = por %p165, %p166
      %p168 = scmp.ne.s32.totalorder %s159, %s160
      %p169 = scmp.eq.s32.totalorder %s32, 0
      %p170 = por %p168, %p169
      %p171 = scmp.ne.s32.totalorder %s159, %s160
      %p172 = scmp.eq.s32.totalorder %s33, 1
      %p173 = por %p171, %p172
      %p175 = scmp.ne.s32.totalorder %s160, %s174
      %p176 = scmp.eq.s32.totalorder %s33, 0
      %p177 = por %p175, %p176
      %s179 = sadd.s32 %s178, 1
      %p182 = scmp.eq.s32.totalorder %s27, 1
      %p183 = scmp.ne.s32.totalorder %s178, %s180
      %p184 = scmp.eq.s32.totalorder %s27, 0
      %p185 = por %p183, %p184
      %p186 = scmp.ne.s32.totalorder %s178, %s180
      %p187 = scmp.eq.s32.totalorder %s32, 1
      %p188 = por %p186, %p187
      %p189 = scmp.ne.s32.totalorder %s180, %s181
      %p190 = scmp.eq.s32.totalorder %s32, 0
      %p191 = por %p189, %p190
      %p192 = scmp.ne.s32.totalorder %s180, %s181
      %p193 = scmp.eq.s32.totalorder %s33, 1
      %p194 = por %p192, %p193
      %p196 = scmp.ne.s32.totalorder %s181, %s195
      %p197 = scmp.eq.s32.totalorder %s33, 0
      %p198 = por %p196, %p197
      %s200 = sadd.s32 %s199, 1
      %p203 = scmp.eq.s32.totalorder %s27, 1
      %p204 = scmp.ne.s32.totalorder %s199, %s201
      %p205 = scmp.eq.s32.totalorder %s27, 0
      %p206 = por %p204, %p205
      %p207 = scmp.ne.s32.totalorder %s199, %s201
      %p208 = scmp.eq.s32.totalorder %s32, 1
      %p209 = por %p207, %p208
      %p210 = scmp.ne.s32.totalorder %s201, %s202
      %p211 = scmp.eq.s32.totalorder %s32, 0
      %p212 = por %p210, %p211
      %p213 = scmp.ne.s32.totalorder %s201, %s202
      %p214 = scmp.eq.s32.totalorder %s33, 1
      %p215 = por %p213, %p214
      %p217 = scmp.ne.s32.totalorder %s202, %s216
      %p218 = scmp.eq.s32.totalorder %s33, 0
      %p219 = por %p217, %p218
      %s221 = sadd.s32 %s220, 1
      %p224 = scmp.eq.s32.totalorder %s27, 1
      %p225 = scmp.ne.s32.totalorder %s220, %s222
      %p226 = scmp.eq.s32.totalorder %s27, 0
      %p227 = por %p225, %p226
      %p228 = scmp.ne.s32.totalorder %s220, %s222
      %p229 = scmp.eq.s32.totalorder %s32, 1
      %p230 = por %p228, %p229
      %p231 = scmp.ne.s32.totalorder %s222, %s223
      %p232 = scmp.eq.s32.totalorder %s32, 0
      %p233 = por %p231, %p232
      %p234 = scmp.ne.s32.totalorder %s222, %s223
      %p235 = scmp.eq.s32.totalorder %s33, 1
      %p236 = por %p234, %p235
      %p238 = scmp.ne.s32.totalorder %s223, %s237
      %p239 = scmp.eq.s32.totalorder %s33, 0
      %p240 = por %p238, %p239
      %s242 = sadd.s32 %s241, 1
      %p245 = scmp.eq.s32.totalorder %s27, 1
      %p246 = scmp.ne.s32.totalorder %s241, %s243
      %p247 = scmp.eq.s32.totalorder %s27, 0
      %p248 = por %p246, %p247
      %p249 = scmp.ne.s32.totalorder %s241, %s243
      %p250 = scmp.eq.s32.totalorder %s32, 1
      %p251 = por %p249, %p250
      %p252 = scmp.ne.s32.totalorder %s243, %s244
      %p253 = scmp.eq.s32.totalorder %s32, 0
      %p254 = por %p252, %p253
      %p255 = scmp.ne.s32.totalorder %s243, %s244
      %p256 = scmp.eq.s32.totalorder %s33, 1
      %p257 = por %p255, %p256
      %p259 = scmp.ne.s32.totalorder %s244, %s258
      %p260 = scmp.eq.s32.totalorder %s33, 0
      %p261 = por %p259, %p260
      %s263 = sadd.s32 %s262, 1
      %p266 = scmp.eq.s32.totalorder %s27, 1
      %p267 = scmp.ne.s32.totalorder %s262, %s264
      %p268 = scmp.eq.s32.totalorder %s27, 0
      %p269 = por %p267, %p268
      %p270 = scmp.ne.s32.totalorder %s262, %s264
      %p271 = scmp.eq.s32.totalorder %s32, 1
      %p272 = por %p270, %p271
      %p273 = scmp.ne.s32.totalorder %s264, %s265
      %p274 = scmp.eq.s32.totalorder %s32, 0
      %p275 = por %p273, %p274
      %p276 = scmp.ne.s32.totalorder %s264, %s265
      %p277 = scmp.eq.s32.totalorder %s33, 1
      %p278 = por %p276, %p277
      %p280 = scmp.ne.s32.totalorder %s265, %s279
      %p281 = scmp.eq.s32.totalorder %s33, 0
      %p282 = por %p280, %p281
      %s284 = sadd.s32 %s283, 1
      %p287 = scmp.eq.s32.totalorder %s27, 1
      %p288 = scmp.ne.s32.totalorder %s283, %s285
      %p289 = scmp.eq.s32.totalorder %s27, 0
      %p290 = por %p288, %p289
      %p291 = scmp.ne.s32.totalorder %s283, %s285
      %p292 = scmp.eq.s32.totalorder %s32, 1
      %p293 = por %p291, %p292
      %p294 = scmp.ne.s32.totalorder %s285, %s286
      %p295 = scmp.eq.s32.totalorder %s32, 0
      %p296 = por %p294, %p295
      %p297 = scmp.ne.s32.totalorder %s285, %s286
      %p298 = scmp.eq.s32.totalorder %s33, 1
      %p299 = por %p297, %p298
      %p301 = scmp.ne.s32.totalorder %s286, %s300
      %p302 = scmp.eq.s32.totalorder %s33, 0
      %p303 = por %p301, %p302
      %s305 = sadd.s32 %s304, 1
      %p308 = scmp.eq.s32.totalorder %s27, 1
      %p309 = scmp.ne.s32.totalorder %s304, %s306
      %p310 = scmp.eq.s32.totalorder %s27, 0
      %p311 = por %p309, %p310
      %p312 = scmp.ne.s32.totalorder %s304, %s306
      %p313 = scmp.eq.s32.totalorder %s32, 1
      %p314 = por %p312, %p313
      %p315 = scmp.ne.s32.totalorder %s306, %s307
      %p316 = scmp.eq.s32.totalorder %s32, 0
      %p317 = por %p315, %p316
      %p318 = scmp.ne.s32.totalorder %s306, %s307
      %p319 = scmp.eq.s32.totalorder %s33, 1
      %p320 = por %p318, %p319
      %p322 = scmp.ne.s32.totalorder %s307, %s321
      %p323 = scmp.eq.s32.totalorder %s33, 0
      %p324 = por %p322, %p323
      %s326 = sadd.s32 %s325, 1
      %p329 = scmp.eq.s32.totalorder %s27, 1
      %p330 = scmp.ne.s32.totalorder %s325, %s327
      %p331 = scmp.eq.s32.totalorder %s27, 0
      %p332 = por %p330, %p331
      %p333 = scmp.ne.s32.totalorder %s325, %s327
      %p334 = scmp.eq.s32.totalorder %s32, 1
      %p335 = por %p333, %p334
      %p336 = scmp.ne.s32.totalorder %s327, %s328
      %p337 = scmp.eq.s32.totalorder %s32, 0
      %p338 = por %p336, %p337
      %p339 = scmp.ne.s32.totalorder %s327, %s328
      %p340 = scmp.eq.s32.totalorder %s33, 1
      %p341 = por %p339, %p340
      %p343 = scmp.ne.s32.totalorder %s328, %s342
      %p344 = scmp.eq.s32.totalorder %s33, 0
      %p345 = por %p343, %p344
      %s347 = sadd.s32 %s346, 1
      %p350 = scmp.eq.s32.totalorder %s27, 1
      %p351 = scmp.ne.s32.totalorder %s346, %s348
      %p352 = scmp.eq.s32.totalorder %s27, 0
      %p353 = por %p351, %p352
      %p354 = scmp.ne.s32.totalorder %s346, %s348
      %p355 = scmp.eq.s32.totalorder %s32, 1
      %p356 = por %p354, %p355
      %p357 = scmp.ne.s32.totalorder %s348, %s349
      %p358 = scmp.eq.s32.totalorder %s32, 0
      %p359 = por %p357, %p358
      %p360 = scmp.ne.s32.totalorder %s348, %s349
      %p361 = scmp.eq.s32.totalorder %s33, 1
      %p362 = por %p360, %p361
      %p364 = scmp.ne.s32.totalorder %s349, %s363
      %p365 = scmp.eq.s32.totalorder %s33, 0
      %p366 = por %p364, %p365
      %s368 = sadd.s32 %s367, 1
      %p371 = scmp.eq.s32.totalorder %s27, 1
      %p372 = scmp.ne.s32.totalorder %s367, %s369
      %p373 = scmp.eq.s32.totalorder %s27, 0
      %p374 = por %p372, %p373
      %p375 = scmp.ne.s32.totalorder %s367, %s369
      %p376 = scmp.eq.s32.totalorder %s32, 1
      %p377 = por %p375, %p376
      %p378 = scmp.ne.s32.totalorder %s369, %s370
      %p379 = scmp.eq.s32.totalorder %s32, 0
      %p380 = por %p378, %p379
      %p381 = scmp.ne.s32.totalorder %s369, %s370
      %p382 = scmp.eq.s32.totalorder %s33, 1
      %p383 = por %p381, %p382
      %p385 = scmp.ne.s32.totalorder %s370, %s384
      %p386 = scmp.eq.s32.totalorder %s33, 0
      %p387 = por %p385, %p386
      %s389 = sadd.s32 %s388, 1
      %p392 = scmp.eq.s32.totalorder %s27, 1
      %p393 = scmp.ne.s32.totalorder %s388, %s390
      %p394 = scmp.eq.s32.totalorder %s27, 0
      %p395 = por %p393, %p394
      %p396 = scmp.ne.s32.totalorder %s388, %s390
      %p397 = scmp.eq.s32.totalorder %s32, 1
      %p398 = por %p396, %p397
      %p399 = scmp.ne.s32.totalorder %s390, %s391
      %p400 = scmp.eq.s32.totalorder %s32, 0
      %p401 = por %p399, %p400
      %p402 = scmp.ne.s32.totalorder %s390, %s391
      %p403 = scmp.eq.s32.totalorder %s33, 1
      %p404 = por %p402, %p403
      %p406 = scmp.ne.s32.totalorder %s391, %s405
      %p407 = scmp.eq.s32.totalorder %s33, 0
      %p408 = por %p406, %p407
      %s409 = ssub.s32 %s34, %s46
      %s410 = ssub.s32 %s35, %s42
      %s411 = sor.u32 %s409, %s410
      %p412 = scmp.eq.s32.totalorder %s411, 0
      %s414 = sadd.s32 %s413, 1
      %s415 = scalar_select %p412, %s413, %s414
      %p418 = pneg %p412
      %p419 = scmp.eq.s32.totalorder %s27, 1
      %p420 = por %p418, %p419
      %p421 = scmp.ne.s32.totalorder %s413, %s416
      %p422 = scmp.eq.s32.totalorder %s27, 0
      %p423 = por %p421, %p422
      %p424 = scmp.ne.s32.totalorder %s413, %s416
      %p425 = scmp.eq.s32.totalorder %s32, 1
      %p426 = por %p424, %p425
      %p427 = scmp.ne.s32.totalorder %s416, %s417
      %p428 = scmp.eq.s32.totalorder %s32, 0
      %p429 = por %p427, %p428
      %p430 = scmp.ne.s32.totalorder %s416, %s417
      %p431 = scmp.eq.s32.totalorder %s33, 1
      %p432 = por %p430, %p431
      %p434 = scmp.ne.s32.totalorder %s417, %s433
      %p435 = scmp.eq.s32.totalorder %s33, 0
      %p436 = por %p434, %p435
      %p437 = scmp.le.s32.totalorder 1, %s27
      %p438 = scmp.lt.s32.totalorder %s27, 3
      %p439 = pnand %p437, %p438
      %p440 = pneg %p439
      // Predicated region
      $region9: #{tpu_custom_call.1} parent=5 // pred_check
        _
      $region10: #{tpu_custom_call.1} parent=5 // pred_check_branch
        %442 = sbr.rel (%p439) target = $region12
      $region11: #{tpu_custom_call.1} parent=5 // pred_region
        %s443 = ssub.s32 %s27, 1
        // Predicated region
        $region13: #{tpu_custom_call.1} parent=11 // pred_check
          %p444 = pneg %p86
        $region14: #{tpu_custom_call.1} parent=11 // pred_check_branch
          %446 = sbr.rel (%p444) target = $region16
        $region15: #{tpu_custom_call.1} parent=11 // pred_region
          _
        $region16: #{tpu_custom_call.1} parent=11 // pred_fallthru
          _
        // Predicated region
        $region17: #{tpu_custom_call.1} parent=11 // pred_check
          %p447 = pneg %p107
        $region18: #{tpu_custom_call.1} parent=11 // pred_check_branch
          %449 = sbr.rel (%p447) target = $region20
        $region19: #{tpu_custom_call.1} parent=11 // pred_region
          _
        $region20: #{tpu_custom_call.1} parent=11 // pred_fallthru
          _
        // Predicated region
        $region21: #{tpu_custom_call.1} parent=11 // pred_check
          %p450 = pneg %p128
        $region22: #{tpu_custom_call.1} parent=11 // pred_check_branch
          %452 = sbr.rel (%p450) target = $region24
        $region23: #{tpu_custom_call.1} parent=11 // pred_region
          _
        $region24: #{tpu_custom_call.1} parent=11 // pred_fallthru
          _
        // Predicated region
        $region25: #{tpu_custom_call.1} parent=11 // pred_check
          %p453 = pneg %p149
        $region26: #{tpu_custom_call.1} parent=11 // pred_check_branch
          %455 = sbr.rel (%p453) target = $region28
        $region27: #{tpu_custom_call.1} parent=11 // pred_region
          _
        $region28: #{tpu_custom_call.1} parent=11 // pred_fallthru
          _
        // Predicated region
        $region29: #{tpu_custom_call.1} parent=11 // pred_check
          %p456 = pneg %p170
        $region30: #{tpu_custom_call.1} parent=11 // pred_check_branch
          %458 = sbr.rel (%p456) target = $region32
        $region31: #{tpu_custom_call.1} parent=11 // pred_region
          _
        $region32: #{tpu_custom_call.1} parent=11 // pred_fallthru
          _
        // Predicated region
        $region33: #{tpu_custom_call.1} parent=11 // pred_check
          %p459 = pneg %p191
        $region34: #{tpu_custom_call.1} parent=11 // pred_check_branch
          %461 = sbr.rel (%p459) target = $region36
        $region35: #{tpu_custom_call.1} parent=11 // pred_region
          _
        $region36: #{tpu_custom_call.1} parent=11 // pred_fallthru
          _
        // Predicated region
        $region37: #{tpu_custom_call.1} parent=11 // pred_check
          %p462 = pneg %p212
        $region38: #{tpu_custom_call.1} parent=11 // pred_check_branch
          %464 = sbr.rel (%p462) target = $region40
        $region39: #{tpu_custom_call.1} parent=11 // pred_region
          _
        $region40: #{tpu_custom_call.1} parent=11 // pred_fallthru
          _
        // Predicated region
        $region41: #{tpu_custom_call.1} parent=11 // pred_check
          %p465 = pneg %p233
        $region42: #{tpu_custom_call.1} parent=11 // pred_check_branch
          %467 = sbr.rel (%p465) target = $region44
        $region43: #{tpu_custom_call.1} parent=11 // pred_region
          _
        $region44: #{tpu_custom_call.1} parent=11 // pred_fallthru
          _
        // Predicated region
        $region45: #{tpu_custom_call.1} parent=11 // pred_check
          %p468 = pneg %p254
        $region46: #{tpu_custom_call.1} parent=11 // pred_check_branch
          %470 = sbr.rel (%p468) target = $region48
        $region47: #{tpu_custom_call.1} parent=11 // pred_region
          _
        $region48: #{tpu_custom_call.1} parent=11 // pred_fallthru
          _
        // Predicated region
        $region49: #{tpu_custom_call.1} parent=11 // pred_check
          %p471 = pneg %p275
        $region50: #{tpu_custom_call.1} parent=11 // pred_check_branch
          %473 = sbr.rel (%p471) target = $region52
        $region51: #{tpu_custom_call.1} parent=11 // pred_region
          _
        $region52: #{tpu_custom_call.1} parent=11 // pred_fallthru
          _
        // Predicated region
        $region53: #{tpu_custom_call.1} parent=11 // pred_check
          %p474 = pneg %p296
        $region54: #{tpu_custom_call.1} parent=11 // pred_check_branch
          %476 = sbr.rel (%p474) target = $region56
        $region55: #{tpu_custom_call.1} parent=11 // pred_region
          _
        $region56: #{tpu_custom_call.1} parent=11 // pred_fallthru
          _
        // Predicated region
        $region57: #{tpu_custom_call.1} parent=11 // pred_check
          %p477 = pneg %p317
        $region58: #{tpu_custom_call.1} parent=11 // pred_check_branch
          %479 = sbr.rel (%p477) target = $region60
        $region59: #{tpu_custom_call.1} parent=11 // pred_region
          _
        $region60: #{tpu_custom_call.1} parent=11 // pred_fallthru
          _
        // Predicated region
        $region61: #{tpu_custom_call.1} parent=11 // pred_check
          %p480 = pneg %p338
        $region62: #{tpu_custom_call.1} parent=11 // pred_check_branch
          %482 = sbr.rel (%p480) target = $region64
        $region63: #{tpu_custom_call.1} parent=11 // pred_region
          %s484 = ssub.s32 512, 512
          %485 = vsyncadd [#allocation7], %s484
          %s486 = sshll.u32 [#allocation6], 4
          %s487 = int_to_ptr.vmem [resolvable:$true] %s486
          %492 = dma.hbm_to_vmem [thread:$0]  %s13, 512, %s487, [#allocation7], 128, 128, 8
        $region64: #{tpu_custom_call.1} parent=11 // pred_fallthru
          _
        // Predicated region
        $region65: #{tpu_custom_call.1} parent=11 // pred_check
          %p493 = pneg %p359
        $region66: #{tpu_custom_call.1} parent=11 // pred_check_branch
          %495 = sbr.rel (%p493) target = $region68
        $region67: #{tpu_custom_call.1} parent=11 // pred_region
          _
        $region68: #{tpu_custom_call.1} parent=11 // pred_fallthru
          _
        // Predicated region
        $region69: #{tpu_custom_call.1} parent=11 // pred_check
          %p496 = pneg %p380
        $region70: #{tpu_custom_call.1} parent=11 // pred_check_branch
          %498 = sbr.rel (%p496) target = $region72
        $region71: #{tpu_custom_call.1} parent=11 // pred_region
          _
        $region72: #{tpu_custom_call.1} parent=11 // pred_fallthru
          _
        // Predicated region
        $region73: #{tpu_custom_call.1} parent=11 // pred_check
          %p499 = pneg %p401
        $region74: #{tpu_custom_call.1} parent=11 // pred_check_branch
          %501 = sbr.rel (%p499) target = $region76
        $region75: #{tpu_custom_call.1} parent=11 // pred_region
          _
        $region76: #{tpu_custom_call.1} parent=11 // pred_fallthru
          _
      $region12: #{tpu_custom_call.1} parent=5 // pred_fallthru
        _
      %p502 = scmp.lt.s32.totalorder %s27, 2
      // Predicated region
      $region77: #{tpu_custom_call.1} parent=5 // pred_check
        %p503 = pneg %p502
      $region78: #{tpu_custom_call.1} parent=5 // pred_check_branch
        %505 = sbr.rel (%p503) target = $region80
      $region79: #{tpu_custom_call.1} parent=5 // pred_region
        // Predicated region
        $region81: #{tpu_custom_call.1} parent=79 // pred_check
          %p506 = pneg %p59
        $region82: #{tpu_custom_call.1} parent=79 // pred_check_branch
          %508 = sbr.rel (%p506) target = $region84
        $region83: #{tpu_custom_call.1} parent=79 // pred_region
          %p509 = scmp.lt.s32.totalorder %s34, 1
          %s510 = scalar_select %p509, %s34, 1
          %s511 = smul.addr %s510, 2
          %s512 = smul.addr %s511, 8
          %s513 = scalar_lea.vmem %s0, %s512
        $region84: #{tpu_custom_call.1} parent=79 // pred_fallthru
          _
      $region80: #{tpu_custom_call.1} parent=5 // pred_fallthru
        _
      %p514 = scmp.le.s32.totalorder 1, %s27
      %p515 = scmp.lt.s32.totalorder %s27, 3
      %p516 = pnand %p514, %p515
      %p517 = pneg %p516
      // Predicated region
      $region85: #{tpu_custom_call.1} parent=5 // pred_check
        _
      $region86: #{tpu_custom_call.1} parent=5 // pred_check_branch
        %519 = sbr.rel (%p516) target = $region88
      $region87: #{tpu_custom_call.1} parent=5 // pred_region
        %s520 = ssub.s32 %s27, 1
        // Predicated region
        $region89: #{tpu_custom_call.1} parent=87 // pred_check
          %p521 = pneg %p338
        $region90: #{tpu_custom_call.1} parent=87 // pred_check_branch
          %523 = sbr.rel (%p521) target = $region92
        $region91: #{tpu_custom_call.1} parent=87 // pred_region
          %524 = dma.done [#allocation7], 512
        $region92: #{tpu_custom_call.1} parent=87 // pred_fallthru
          _
        %p525 = scmp.lt.s32.totalorder %s36, 1
        %s526 = scalar_select %p525, %s36, 1
        %s527 = smul.addr %s526, 2
        %s528 = smul.addr %s527, 8
        %s529 = scalar_lea.vmem %s0, %s528
        %p530 = pneg %p65
        %p531 = pneg %p62
        %p532 = pneg %p86
        %p533 = pneg %p83
        %p534 = pneg %p107
        %p535 = pneg %p104
        %p536 = pneg %p128
        %p537 = pneg %p125
        %p538 = pneg %p149
        %p539 = pneg %p146
        %p540 = pneg %p170
        %p541 = pneg %p167
        %p542 = pneg %p191
        %p543 = pneg %p188
        %p544 = pneg %p212
        %p545 = pneg %p209
        %p546 = pneg %p233
        %p547 = pneg %p230
        %p548 = pneg %p254
        %p549 = pneg %p251
        %p550 = pneg %p275
        %p551 = pneg %p272
        %p552 = pneg %p296
        %p553 = pneg %p293
        %p554 = pneg %p317
        %p555 = pneg %p314
        %p556 = pneg %p338
        %p557 = pneg %p335
        %p558 = pneg %p359
        %p559 = pneg %p356
        %p560 = pneg %p380
        %p561 = pneg %p377
        %p562 = pneg %p401
        %p563 = pneg %p398
        %p564 = pneg %p429
        %p565 = pneg %p426
        %s566 = sand.u32 %s416, 1
        %s567 = scalar_lea.sflag [#allocation8], %s566
        %s568 = sand.u32 %s416, 1
        %s569 = smul.addr %s568, 16
        %s570 = scalar_lea.vmem [#allocation9], %s569
        %p571 = scmp.lt.s32.totalorder %s36, 1
        %s572 = scalar_select %p571, %s36, 1
        %s573 = smul.addr %s572, 2
        %s574 = smul.addr %s573, 8
        %s575 = scalar_lea.vmem %s0, %s574
        %s576 = smul.u32 2, %s37
        %p577 = scmp.eq.s32.totalorder %s37, 0
        // Predicated region
        $region93: #{tpu_custom_call.1} parent=87 // pred_check
          %p578 = pneg %p577
        $region94: #{tpu_custom_call.1} parent=87 // pred_check_branch
          %580 = sbr.rel (%p578) target = $region96
        $region95: #{tpu_custom_call.1} parent=87 // pred_region
          %v581 = vld [vmem:[%s575] sm:$0xff]
          %v582 = vld [vmem:[%s575 + $0x8] sm:$0xff]
          %v583 = vld [vmem:[%s1] sm:$0x1]
          %v584 = vld [vmem:[%s2] sm:$0x1]
          %vm585 = vcmask 261120
          %v586 = vsel %vm585, %v581, 0.0
          %587 = vadd.xlane.f32.xlu0 %v586
          %v588 = vpop.xlane.xlu0 %587
          %v589 = vsel %vm585, %v582, 0.0
          %590 = vadd.xlane.f32.xlu0 %v589
          %v591 = vpop.xlane.xlu0 %590
          %v592 = vrcp.pop 32.0
          %v593 = vmul.f32 %v588, %v592
          %v594 = vmul.f32 %v591, %v592
          %v595 = vsub.f32 %v581, %v593
          %v596 = vsub.f32 %v582, %v594
          %v597 = vmul.f32 %v595, %v595
          %v598 = vmul.f32 %v596, %v596
          %v599 = vsel %vm585, %v597, 0.0
          %600 = vadd.xlane.f32.xlu0 %v599
          %v601 = vpop.xlane.xlu0 %600
          %v602 = vsel %vm585, %v598, 0.0
          %603 = vadd.xlane.f32.xlu0 %v602
          %v604 = vpop.xlane.xlu0 %603
          %v605 = vmul.f32 %v601, %v592
          %v606 = vmul.f32 %v604, %v592
          %v607 = vadd.f32 %v605, 1e-05
          %v608 = vadd.f32 %v606, 1e-05
          %v609 = vrsqrt.pop %v607
          %v610 = vrsqrt.pop %v608
          %v611 = vmul.f32 %v595, %v609
          %v612 = vmul.f32 %v596, %v610
          %v614 = vlaneseq
          %v615 = vshrl.u32 %v614, 7
          %v616 = vsub.s32 0, %v615
          %v617 = vrot.slane %v583, %v616
          %v619 = vmul.f32 %v611, %v617
          %v620 = vmul.f32 %v612, %v617
          %v622 = vlaneseq
          %v623 = vshrl.u32 %v622, 7
          %v624 = vsub.s32 0, %v623
          %v625 = vrot.slane %v584, %v624
          %v627 = vadd.f32 %v619, %v625
          %v628 = vadd.f32 %v620, %v625
          %629 = vst.msk [vmem:[#allocation2] sm:$0xff] %vm585, %v627
          %630 = vst.msk [vmem:[#allocation2 + $0x8] sm:$0xff] %vm585, %v628
          %v631 = vld [vmem:[%s5] sm:$0xff]
          %v632 = vld [vmem:[%s5 + $0x8] sm:$0xff]
          %v633 = vld [vmem:[%s5 + $0x10] sm:$0xff]
          %v634 = vld [vmem:[%s5 + $0x18] sm:$0xff]
          %v635 = vld [vmem:[%s6] sm:$0x1]
          %v637 = vlaneseq
          %v638 = vshrl.u32 %v637, 7
          %v639 = vsub.s32 0, %v638
          %v640 = vrot.slane %v635, %v639
          %v643 = vsel %vm585, %v627, 0
          %v646 = vsel %vm585, %v628, 0
          %648 = vmatprep.subr.mxu0 0.0
          %649 = vmatpush1.msra.mxu0 %v631
          %650 = vmatprep.subr.mxu0 0.0
          %651 = vmatpush1.msra.mxu0 %v632
          %652 = vmatprep.subr.mxu0 0.0
          %653 = vmatpush1.msra.mxu0 %v633
          %654 = vmatprep.subr.mxu0 0.0
          %655 = vmatpush1.msra.mxu0 %v634
          %656 = vmatprep.subr.mxu0 0.0
          %657 = vmatpush1.msra.mxu0 0.0
          %658 = vmatprep.subr.mxu0 0.0
          %659 = vmatpush1.msra.mxu0 0.0
          %660 = vmatprep.subr.mxu0 0.0
          %661 = vmatpush1.msra.mxu0 0.0
          %662 = vmatprep.subr.mxu0 0.0
          %663 = vmatpush1.msra.mxu0 0.0
          %664 = vmatprep.subr.mxu0 0.0
          %665 = vmatpush1.msra.mxu0 0.0
          %666 = vmatprep.subr.mxu0 0.0
          %667 = vmatpush1.msra.mxu0 0.0
          %668 = vmatprep.subr.mxu0 0.0
          %669 = vmatpush1.msra.mxu0 0.0
          %670 = vmatprep.subr.mxu0 0.0
          %671 = vmatpush1.msra.mxu0 0.0
          %672 = vmatprep.subr.mxu0 0.0
          %673 = vmatpush1.msra.mxu0 0.0
          %674 = vmatprep.subr.mxu0 0.0
          %675 = vmatpush1.msra.mxu0 0.0
          %676 = vmatprep.subr.mxu0 0.0
          %677 = vmatpush1.msra.mxu0 0.0
          %678 = vmatprep.subr.mxu0 0.0
          %679 = vmatpush1.msra.mxu0 0.0
          %680 = vmatprep.subr.mxu0 0.0
          %681 = vmatpush1.msra.mxu0 0.0
          %682 = vmatprep.subr.mxu0 0.0
          %683 = vmatpush1.msra.mxu0 0.0
          %684 = vmatprep.subr.mxu0 0.0
          %685 = vmatpush1.msra.mxu0 0.0
          %686 = vmatprep.subr.mxu0 0.0
          %687 = vmatpush1.msra.mxu0 0.0
          %688 = vmatprep.subr.mxu0 0.0
          %689 = vmatpush1.msra.mxu0 0.0
          %690 = vmatprep.subr.mxu0 0.0
          %691 = vmatpush1.msra.mxu0 0.0
          %692 = vmatprep.subr.mxu0 0.0
          %693 = vmatpush1.msra.mxu0 0.0
          %694 = vmatprep.subr.mxu0 0.0
          %695 = vmatpush1.msra.mxu0 0.0
          %696 = vmatprep.subr.mxu0 0.0
          %697 = vmatpush1.msra.mxu0 0.0
          %698 = vmatprep.subr.mxu0 0.0
          %699 = vmatpush1.msra.mxu0 0.0
          %700 = vmatprep.subr.mxu0 0.0
          %701 = vmatpush1.msra.mxu0 0.0
          %702 = vmatprep.subr.mxu0 0.0
          %703 = vmatpush1.msra.mxu0 0.0
          %704 = vmatprep.subr.mxu0 0.0
          %705 = vmatpush1.msra.mxu0 0.0
          %706 = vmatprep.subr.mxu0 0.0
          %707 = vmatpush1.msra.mxu0 0.0
          %708 = vmatprep.subr.mxu0 0.0
          %709 = vmatpush1.msra.mxu0 0.0
          %710 = vmatprep.subr.mxu0 0.0
          %711 = vmatpush1.msra.mxu0 0.0
          %712 = vmatprep.mubr.f32.mxu0 0.0
          %713 = vmatmul.mubr.f32.gmra.mrb[0].mxu0 %v643
          %v714 = vpop.f32.mrb[0].mxu0
          %v715 = vadd.f32 %v640, %v714
          %v716 = vpop.f32.mrb[0].mxu0
          %717 = vmatprep.mubr.f32.mxu0 0.0
          %718 = vmatmul.mubr.f32.gmra.mrb[0].mxu0 %v646
          %v719 = vpop.f32.mrb[0].mxu0
          %v720 = vadd.f32 %v640, %v719
          %v721 = vpop.f32.mrb[0].mxu0
          %722 = vdwg.mxu0
          %723 = vst.msk [vmem:[#allocation3] sm:$0xff] %vm585, %v715
          %724 = vst.msk [vmem:[#allocation3 + $0x8] sm:$0xff] %vm585, %v720
          %v725 = vld [vmem:[%s7] sm:$0xff]
          %v726 = vld [vmem:[%s7 + $0x8] sm:$0xff]
          %v727 = vld [vmem:[%s7 + $0x10] sm:$0xff]
          %v728 = vld [vmem:[%s7 + $0x18] sm:$0xff]
          %v729 = vld [vmem:[%s8] sm:$0x1]
          %v731 = vlaneseq
          %v732 = vshrl.u32 %v731, 7
          %v733 = vsub.s32 0, %v732
          %v734 = vrot.slane %v729, %v733
          %736 = vmatprep.subr.mxu0 0.0
          %737 = vmatpush1.msra.mxu0 %v725
          %738 = vmatprep.subr.mxu0 0.0
          %739 = vmatpush1.msra.mxu0 %v726
          %740 = vmatprep.subr.mxu0 0.0
          %741 = vmatpush1.msra.mxu0 %v727
          %742 = vmatprep.subr.mxu0 0.0
          %743 = vmatpush1.msra.mxu0 %v728
          %744 = vmatprep.subr.mxu0 0.0
          %745 = vmatpush1.msra.mxu0 0.0
          %746 = vmatprep.subr.mxu0 0.0
          %747 = vmatpush1.msra.mxu0 0.0
          %748 = vmatprep.subr.mxu0 0.0
          %749 = vmatpush1.msra.mxu0 0.0
          %750 = vmatprep.subr.mxu0 0.0
          %751 = vmatpush1.msra.mxu0 0.0
          %752 = vmatprep.subr.mxu0 0.0
          %753 = vmatpush1.msra.mxu0 0.0
          %754 = vmatprep.subr.mxu0 0.0
          %755 = vmatpush1.msra.mxu0 0.0
          %756 = vmatprep.subr.mxu0 0.0
          %757 = vmatpush1.msra.mxu0 0.0
          %758 = vmatprep.subr.mxu0 0.0
          %759 = vmatpush1.msra.mxu0 0.0
          %760 = vmatprep.subr.mxu0 0.0
          %761 = vmatpush1.msra.mxu0 0.0
          %762 = vmatprep.subr.mxu0 0.0
          %763 = vmatpush1.msra.mxu0 0.0
          %764 = vmatprep.subr.mxu0 0.0
          %765 = vmatpush1.msra.mxu0 0.0
          %766 = vmatprep.subr.mxu0 0.0
          %767 = vmatpush1.msra.mxu0 0.0
          %768 = vmatprep.subr.mxu0 0.0
          %769 = vmatpush1.msra.mxu0 0.0
          %770 = vmatprep.subr.mxu0 0.0
          %771 = vmatpush1.msra.mxu0 0.0
          %772 = vmatprep.subr.mxu0 0.0
          %773 = vmatpush1.msra.mxu0 0.0
          %774 = vmatprep.subr.mxu0 0.0
          %775 = vmatpush1.msra.mxu0 0.0
          %776 = vmatprep.subr.mxu0 0.0
          %777 = vmatpush1.msra.mxu0 0.0
          %778 = vmatprep.subr.mxu0 0.0
          %779 = vmatpush1.msra.mxu0 0.0
          %780 = vmatprep.subr.mxu0 0.0
          %781 = vmatpush1.msra.mxu0 0.0
          %782 = vmatprep.subr.mxu0 0.0
          %783 = vmatpush1.msra.mxu0 0.0
          %784 = vmatprep.subr.mxu0 0.0
          %785 = vmatpush1.msra.mxu0 0.0
          %786 = vmatprep.subr.mxu0 0.0
          %787 = vmatpush1.msra.mxu0 0.0
          %788 = vmatprep.subr.mxu0 0.0
          %789 = vmatpush1.msra.mxu0 0.0
          %790 = vmatprep.subr.mxu0 0.0
          %791 = vmatpush1.msra.mxu0 0.0
          %792 = vmatprep.subr.mxu0 0.0
          %793 = vmatpush1.msra.mxu0 0.0
          %794 = vmatprep.subr.mxu0 0.0
          %795 = vmatpush1.msra.mxu0 0.0
          %796 = vmatprep.subr.mxu0 0.0
          %797 = vmatpush1.msra.mxu0 0.0
          %798 = vmatprep.subr.mxu0 0.0
          %799 = vmatpush1.msra.mxu0 0.0
          %800 = vmatprep.mubr.f32.mxu0 0.0
          %801 = vmatmul.mubr.f32.gmra.mrb[0].mxu0 %v643
          %v802 = vpop.f32.mrb[0].mxu0
          %v803 = vadd.f32 %v734, %v802
          %v804 = vpop.f32.mrb[0].mxu0
          %805 = vmatprep.mubr.f32.mxu0 0.0
          %806 = vmatmul.mubr.f32.gmra.mrb[0].mxu0 %v646
          %v807 = vpop.f32.mrb[0].mxu0
          %v808 = vadd.f32 %v734, %v807
          %v809 = vpop.f32.mrb[0].mxu0
          %810 = vdwg.mxu0
          %811 = vst.msk [vmem:[#allocation4] sm:$0xff] %vm585, %v803
          %812 = vst.msk [vmem:[#allocation4 + $0x8] sm:$0xff] %vm585, %v808
        $region96: #{tpu_custom_call.1} parent=87 // pred_fallthru
          _
        %s813 = smul.u32 %s37, 16
        %s814 = scalar_lea.vmem %s575, %s813
        %v815 = vld [vmem:[%s814] sm:$0xff]
        %v816 = vld [vmem:[%s814 + $0x8] sm:$0xff]
        %s817 = scalar_lea.vmem [#allocation2], %s813
        %v818 = vld [vmem:[%s817] sm:$0xff]
        %v819 = vld [vmem:[%s817 + $0x8] sm:$0xff]
        %v820 = vld [vmem:[%s3] sm:$0xff]
        %v821 = vld [vmem:[%s3 + $0x8] sm:$0xff]
        %v822 = vld [vmem:[%s3 + $0x10] sm:$0xff]
        %v823 = vld [vmem:[%s3 + $0x18] sm:$0xff]
        %v824 = vld [vmem:[%s4] sm:$0x1]
        %v826 = vlaneseq
        %v827 = vshrl.u32 %v826, 7
        %v828 = vsub.s32 0, %v827
        %v829 = vrot.slane %v824, %v828
        %vm831 = vcmask 261120
        %v833 = vsel %vm831, %v818, 0
        %v836 = vsel %vm831, %v819, 0
        %838 = vmatprep.subr.mxu0 0.0
        %839 = vmatpush1.msra.mxu0 %v820
        %840 = vmatprep.subr.mxu0 0.0
        %841 = vmatpush1.msra.mxu0 %v821
        %842 = vmatprep.subr.mxu0 0.0
        %843 = vmatpush1.msra.mxu0 %v822
        %844 = vmatprep.subr.mxu0 0.0
        %845 = vmatpush1.msra.mxu0 %v823
        %846 = vmatprep.subr.mxu0 0.0
        %847 = vmatpush1.msra.mxu0 0.0
        %848 = vmatprep.subr.mxu0 0.0
        %849 = vmatpush1.msra.mxu0 0.0
        %850 = vmatprep.subr.mxu0 0.0
        %851 = vmatpush1.msra.mxu0 0.0
        %852 = vmatprep.subr.mxu0 0.0
        %853 = vmatpush1.msra.mxu0 0.0
        %854 = vmatprep.subr.mxu0 0.0
        %855 = vmatpush1.msra.mxu0 0.0
        %856 = vmatprep.subr.mxu0 0.0
        %857 = vmatpush1.msra.mxu0 0.0
        %858 = vmatprep.subr.mxu0 0.0
        %859 = vmatpush1.msra.mxu0 0.0
        %860 = vmatprep.subr.mxu0 0.0
        %861 = vmatpush1.msra.mxu0 0.0
        %862 = vmatprep.subr.mxu0 0.0
        %863 = vmatpush1.msra.mxu0 0.0
        %864 = vmatprep.subr.mxu0 0.0
        %865 = vmatpush1.msra.mxu0 0.0
        %866 = vmatprep.subr.mxu0 0.0
        %867 = vmatpush1.msra.mxu0 0.0
        %868 = vmatprep.subr.mxu0 0.0
        %869 = vmatpush1.msra.mxu0 0.0
        %870 = vmatprep.subr.mxu0 0.0
        %871 = vmatpush1.msra.mxu0 0.0
        %872 = vmatprep.subr.mxu0 0.0
        %873 = vmatpush1.msra.mxu0 0.0
        %874 = vmatprep.subr.mxu0 0.0
        %875 = vmatpush1.msra.mxu0 0.0
        %876 = vmatprep.subr.mxu0 0.0
        %877 = vmatpush1.msra.mxu0 0.0
        %878 = vmatprep.subr.mxu0 0.0
        %879 = vmatpush1.msra.mxu0 0.0
        %880 = vmatprep.subr.mxu0 0.0
        %881 = vmatpush1.msra.mxu0 0.0
        %882 = vmatprep.subr.mxu0 0.0
        %883 = vmatpush1.msra.mxu0 0.0
        %884 = vmatprep.subr.mxu0 0.0
        %885 = vmatpush1.msra.mxu0 0.0
        %886 = vmatprep.subr.mxu0 0.0
        %887 = vmatpush1.msra.mxu0 0.0
        %888 = vmatprep.subr.mxu0 0.0
        %889 = vmatpush1.msra.mxu0 0.0
        %890 = vmatprep.subr.mxu0 0.0
        %891 = vmatpush1.msra.mxu0 0.0
        %892 = vmatprep.subr.mxu0 0.0
        %893 = vmatpush1.msra.mxu0 0.0
        %894 = vmatprep.subr.mxu0 0.0
        %895 = vmatpush1.msra.mxu0 0.0
        %896 = vmatprep.subr.mxu0 0.0
        %897 = vmatpush1.msra.mxu0 0.0
        %898 = vmatprep.subr.mxu0 0.0
        %899 = vmatpush1.msra.mxu0 0.0
        %900 = vmatprep.subr.mxu0 0.0
        %901 = vmatpush1.msra.mxu0 0.0
        %902 = vmatprep.mubr.f32.mxu0 0.0
        %903 = vmatmul.mubr.f32.gmra.mrb[0].mxu0 %v833
        %v904 = vpop.f32.mrb[0].mxu0
        %v905 = vadd.f32 %v829, %v904
        %v906 = vpop.f32.mrb[0].mxu0
        %907 = vmatprep.mubr.f32.mxu0 0.0
        %908 = vmatmul.mubr.f32.gmra.mrb[0].mxu0 %v836
        %v909 = vpop.f32.mrb[0].mxu0
        %v910 = vadd.f32 %v829, %v909
        %v911 = vpop.f32.mrb[0].mxu0
        %912 = vdwg.mxu0
        %v913 = vmul.f32 %v905, 0.35355338
        %v914 = vmul.f32 %v910, 0.35355338
        %v915 = vld [vmem:[#allocation3] sm:$0xff]
        %v916 = vld [vmem:[#allocation3 + $0x8] sm:$0xff]
        %vm917 = vcmask 64512
        %v919 = vsel %vm917, %v913, 0
        %v922 = vsel %vm917, %v914, 0
        %v925 = vsel %vm917, %v915, 0
        %v928 = vsel %vm917, %v916, 0
        %930 = vmatprep.subr.mxu0 0.0
        %931 = vmatpush1.xpose.msra.mxu0 %v925
        %932 = vmatprep.subr.mxu0 0.0
        %933 = vmatpush1.xpose.msra.mxu0 %v928
        %934 = vmatprep.subr.mxu0 0.0
        %935 = vmatpush1.xpose.msra.mxu0 0.0
        %936 = vmatprep.subr.mxu0 0.0
        %937 = vmatpush1.xpose.msra.mxu0 0.0
        %938 = vmatprep.subr.mxu0 0.0
        %939 = vmatpush1.xpose.msra.mxu0 0.0
        %940 = vmatprep.subr.mxu0 0.0
        %941 = vmatpush1.xpose.msra.mxu0 0.0
        %942 = vmatprep.subr.mxu0 0.0
        %943 = vmatpush1.xpose.msra.mxu0 0.0
        %944 = vmatprep.subr.mxu0 0.0
        %945 = vmatpush1.xpose.msra.mxu0 0.0
        %946 = vmatprep.subr.mxu0 0.0
        %947 = vmatpush1.xpose.msra.mxu0 0.0
        %948 = vmatprep.subr.mxu0 0.0
        %949 = vmatpush1.xpose.msra.mxu0 0.0
        %950 = vmatprep.subr.mxu0 0.0
        %951 = vmatpush1.xpose.msra.mxu0 0.0
        %952 = vmatprep.subr.mxu0 0.0
        %953 = vmatpush1.xpose.msra.mxu0 0.0
        %954 = vmatprep.subr.mxu0 0.0
        %955 = vmatpush1.xpose.msra.mxu0 0.0
        %956 = vmatprep.subr.mxu0 0.0
        %957 = vmatpush1.xpose.msra.mxu0 0.0
        %958 = vmatprep.subr.mxu0 0.0
        %959 = vmatpush1.xpose.msra.mxu0 0.0
        %960 = vmatprep.subr.mxu0 0.0
        %961 = vmatpush1.xpose.msra.mxu0 0.0
        %962 = vmatprep.subr.mxu0 0.0
        %963 = vmatpush1.xpose.msra.mxu0 0.0
        %964 = vmatprep.subr.mxu0 0.0
        %965 = vmatpush1.xpose.msra.mxu0 0.0
        %966 = vmatprep.subr.mxu0 0.0
        %967 = vmatpush1.xpose.msra.mxu0 0.0
        %968 = vmatprep.subr.mxu0 0.0
        %969 = vmatpush1.xpose.msra.mxu0 0.0
        %970 = vmatprep.subr.mxu0 0.0
        %971 = vmatpush1.xpose.msra.mxu0 0.0
        %972 = vmatprep.subr.mxu0 0.0
        %973 = vmatpush1.xpose.msra.mxu0 0.0
        %974 = vmatprep.subr.mxu0 0.0
        %975 = vmatpush1.xpose.msra.mxu0 0.0
        %976 = vmatprep.subr.mxu0 0.0
        %977 = vmatpush1.xpose.msra.mxu0 0.0
        %978 = vmatprep.subr.mxu0 0.0
        %979 = vmatpush1.xpose.msra.mxu0 0.0
        %980 = vmatprep.subr.mxu0 0.0
        %981 = vmatpush1.xpose.msra.mxu0 0.0
        %982 = vmatprep.subr.mxu0 0.0
        %983 = vmatpush1.xpose.msra.mxu0 0.0
        %984 = vmatprep.subr.mxu0 0.0
        %985 = vmatpush1.xpose.msra.mxu0 0.0
        %986 = vmatprep.subr.mxu0 0.0
        %987 = vmatpush1.xpose.msra.mxu0 0.0
        %988 = vmatprep.subr.mxu0 0.0
        %989 = vmatpush1.xpose.msra.mxu0 0.0
        %990 = vmatprep.subr.mxu0 0.0
        %991 = vmatpush1.xpose.msra.mxu0 0.0
        %992 = vmatprep.subr.mxu0 0.0
        %993 = vmatpush1.xpose.msra.mxu0 0.0
        %994 = vmatprep.mubr.f32.mxu0 0.0
        %995 = vmatmul.mubr.f32.gmra.mrb[0].mxu0 %v919
        %v996 = vpop.f32.mrb[0].mxu0
        %v997 = vadd.f32 0.0, %v996
        %v998 = vpop.f32.mrb[0].mxu0
        %999 = vmatprep.mubr.f32.mxu0 0.0
        %1000 = vmatmul.mubr.f32.gmra.mrb[0].mxu0 %v922
        %v1001 = vpop.f32.mrb[0].mxu0
        %v1002 = vadd.f32 0.0, %v1001
        %v1003 = vpop.f32.mrb[0].mxu0
        %1004 = vdwg.mxu0
        %vm1005 = vcmask 130048
        %v1006 = vsel %vm1005, %v997, -inf
        %1007 = vmax.xlane.f32.xlu0 %v1006
        %v1008 = vpop.xlane.xlu0 %1007
        %v1009 = vsel %vm1005, %v1002, -inf
        %1010 = vmax.xlane.f32.xlu0 %v1009
        %v1011 = vpop.xlane.xlu0 %1010
        %v1012 = vsub.f32 %v997, %v1008
        %v1013 = vsub.f32 %v1002, %v1011
        %v1014 = vmul.f32 %v1012, 1.442695
        %v1015 = vpow.pop %v1014
        %v1016 = vmul.f32 %v1013, 1.442695
        %v1017 = vpow.pop %v1016
        %v1018 = vsel %vm1005, %v1015, 0.0
        %1019 = vadd.xlane.f32.xlu0 %v1018
        %v1020 = vpop.xlane.xlu0 %1019
        %v1021 = vsel %vm1005, %v1017, 0.0
        %1022 = vadd.xlane.f32.xlu0 %v1021
        %v1023 = vpop.xlane.xlu0 %1022
        %v1024 = vrcp.pop %v1020
        %v1025 = vrcp.pop %v1023
        %v1026 = vmul.f32 %v1015, %v1024
        %v1027 = vmul.f32 %v1017, %v1025
        %v1028 = vld [vmem:[#allocation4] sm:$0xff]
        %v1029 = vld [vmem:[#allocation4 + $0x8] sm:$0xff]
        %v1031 = vsel %vm1005, %v1026, 0
        %v1034 = vsel %vm1005, %v1027, 0
        %1036 = vmatprep.subr.mxu0 0.0
        %1037 = vmatpush1.msra.mxu0 %v1028
        %1038 = vmatprep.subr.mxu0 0.0
        %1039 = vmatpush1.msra.mxu0 %v1029
        %1040 = vmatprep.subr.mxu0 0.0
        %1041 = vmatpush1.msra.mxu0 0.0
        %1042 = vmatprep.subr.mxu0 0.0
        %1043 = vmatpush1.msra.mxu0 0.0
        %1044 = vmatprep.subr.mxu0 0.0
        %1045 = vmatpush1.msra.mxu0 0.0
        %1046 = vmatprep.subr.mxu0 0.0
        %1047 = vmatpush1.msra.mxu0 0.0
        %1048 = vmatprep.subr.mxu0 0.0
        %1049 = vmatpush1.msra.mxu0 0.0
        %1050 = vmatprep.subr.mxu0 0.0
        %1051 = vmatpush1.msra.mxu0 0.0
        %1052 = vmatprep.subr.mxu0 0.0
        %1053 = vmatpush1.msra.mxu0 0.0
        %1054 = vmatprep.subr.mxu0 0.0
        %1055 = vmatpush1.msra.mxu0 0.0
        %1056 = vmatprep.subr.mxu0 0.0
        %1057 = vmatpush1.msra.mxu0 0.0
        %1058 = vmatprep.subr.mxu0 0.0
        %1059 = vmatpush1.msra.mxu0 0.0
        %1060 = vmatprep.subr.mxu0 0.0
        %1061 = vmatpush1.msra.mxu0 0.0
        %1062 = vmatprep.subr.mxu0 0.0
        %1063 = vmatpush1.msra.mxu0 0.0
        %1064 = vmatprep.subr.mxu0 0.0
        %1065 = vmatpush1.msra.mxu0 0.0
        %1066 = vmatprep.subr.mxu0 0.0
        %1067 = vmatpush1.msra.mxu0 0.0
        %1068 = vmatprep.subr.mxu0 0.0
        %1069 = vmatpush1.msra.mxu0 0.0
        %1070 = vmatprep.subr.mxu0 0.0
        %1071 = vmatpush1.msra.mxu0 0.0
        %1072 = vmatprep.subr.mxu0 0.0
        %1073 = vmatpush1.msra.mxu0 0.0
        %1074 = vmatprep.subr.mxu0 0.0
        %1075 = vmatpush1.msra.mxu0 0.0
        %1076 = vmatprep.subr.mxu0 0.0
        %1077 = vmatpush1.msra.mxu0 0.0
        %1078 = vmatprep.subr.mxu0 0.0
        %1079 = vmatpush1.msra.mxu0 0.0
        %1080 = vmatprep.subr.mxu0 0.0
        %1081 = vmatpush1.msra.mxu0 0.0
        %1082 = vmatprep.subr.mxu0 0.0
        %1083 = vmatpush1.msra.mxu0 0.0
        %1084 = vmatprep.subr.mxu0 0.0
        %1085 = vmatpush1.msra.mxu0 0.0
        %1086 = vmatprep.subr.mxu0 0.0
        %1087 = vmatpush1.msra.mxu0 0.0
        %1088 = vmatprep.subr.mxu0 0.0
        %1089 = vmatpush1.msra.mxu0 0.0
        %1090 = vmatprep.subr.mxu0 0.0
        %1091 = vmatpush1.msra.mxu0 0.0
        %1092 = vmatprep.subr.mxu0 0.0
        %1093 = vmatpush1.msra.mxu0 0.0
        %1094 = vmatprep.subr.mxu0 0.0
        %1095 = vmatpush1.msra.mxu0 0.0
        %1096 = vmatprep.subr.mxu0 0.0
        %1097 = vmatpush1.msra.mxu0 0.0
        %1098 = vmatprep.subr.mxu0 0.0
        %1099 = vmatpush1.msra.mxu0 0.0
        %1100 = vmatprep.mubr.f32.mxu0 0.0
        %1101 = vmatmul.mubr.f32.gmra.mrb[0].mxu0 %v1031
        %v1102 = vpop.f32.mrb[0].mxu0
        %v1103 = vadd.f32 0.0, %v1102
        %v1104 = vpop.f32.mrb[0].mxu0
        %1105 = vmatprep.mubr.f32.mxu0 0.0
        %1106 = vmatmul.mubr.f32.gmra.mrb[0].mxu0 %v1034
        %v1107 = vpop.f32.mrb[0].mxu0
        %v1108 = vadd.f32 0.0, %v1107
        %v1109 = vpop.f32.mrb[0].mxu0
        %1110 = vdwg.mxu0
        %1111 = vst.msk [vmem:[#allocation5] sm:$0xff] %vm917, %v1103
        %1112 = vst.msk [vmem:[#allocation5 + $0x8] sm:$0xff] %vm917, %v1108
        %v1113 = vld [vmem:[#allocation3] sm:$0xff]
        %v1114 = vld [vmem:[#allocation3 + $0x8] sm:$0xff]
        %1115 = vrot.lane.b32.xlu0 %v913, 120
        %v1116 = vpop.permute.xlu0 %1115
        %1117 = vrot.lane.b32.xlu0 %v914, 120
        %v1118 = vpop.permute.xlu0 %1117
        %1121 = vrot.lane.b32.xlu0 %v1113, 120
        %v1122 = vpop.permute.xlu0 %1121
        %1123 = vrot.lane.b32.xlu0 %v1114, 120
        %v1124 = vpop.permute.xlu0 %1123
        %v1125 = vsel %vm917, %v1116, 0
        %v1127 = vsel %vm917, %v1118, 0
        %v1129 = vsel %vm917, %v1122, 0
        %v1131 = vsel %vm917, %v1124, 0
        %1133 = vmatprep.subr.mxu0 0.0
        %1134 = vmatpush1.xpose.msra.mxu0 %v1129
        %1135 = vmatprep.subr.mxu0 0.0
        %1136 = vmatpush1.xpose.msra.mxu0 %v1131
        %1137 = vmatprep.subr.mxu0 0.0
        %1138 = vmatpush1.xpose.msra.mxu0 0.0
        %1139 = vmatprep.subr.mxu0 0.0
        %1140 = vmatpush1.xpose.msra.mxu0 0.0
        %1141 = vmatprep.subr.mxu0 0.0
        %1142 = vmatpush1.xpose.msra.mxu0 0.0
        %1143 = vmatprep.subr.mxu0 0.0
        %1144 = vmatpush1.xpose.msra.mxu0 0.0
        %1145 = vmatprep.subr.mxu0 0.0
        %1146 = vmatpush1.xpose.msra.mxu0 0.0
        %1147 = vmatprep.subr.mxu0 0.0
        %1148 = vmatpush1.xpose.msra.mxu0 0.0
        %1149 = vmatprep.subr.mxu0 0.0
        %1150 = vmatpush1.xpose.msra.mxu0 0.0
        %1151 = vmatprep.subr.mxu0 0.0
        %1152 = vmatpush1.xpose.msra.mxu0 0.0
        %1153 = vmatprep.subr.mxu0 0.0
        %1154 = vmatpush1.xpose.msra.mxu0 0.0
        %1155 = vmatprep.subr.mxu0 0.0
        %1156 = vmatpush1.xpose.msra.mxu0 0.0
        %1157 = vmatprep.subr.mxu0 0.0
        %1158 = vmatpush1.xpose.msra.mxu0 0.0
        %1159 = vmatprep.subr.mxu0 0.0
        %1160 = vmatpush1.xpose.msra.mxu0 0.0
        %1161 = vmatprep.subr.mxu0 0.0
        %1162 = vmatpush1.xpose.msra.mxu0 0.0
        %1163 = vmatprep.subr.mxu0 0.0
        %1164 = vmatpush1.xpose.msra.mxu0 0.0
        %1165 = vmatprep.subr.mxu0 0.0
        %1166 = vmatpush1.xpose.msra.mxu0 0.0
        %1167 = vmatprep.subr.mxu0 0.0
        %1168 = vmatpush1.xpose.msra.mxu0 0.0
        %1169 = vmatprep.subr.mxu0 0.0
        %1170 = vmatpush1.xpose.msra.mxu0 0.0
        %1171 = vmatprep.subr.mxu0 0.0
        %1172 = vmatpush1.xpose.msra.mxu0 0.0
        %1173 = vmatprep.subr.mxu0 0.0
        %1174 = vmatpush1.xpose.msra.mxu0 0.0
        %1175 = vmatprep.subr.mxu0 0.0
        %1176 = vmatpush1.xpose.msra.mxu0 0.0
        %1177 = vmatprep.subr.mxu0 0.0
        %1178 = vmatpush1.xpose.msra.mxu0 0.0
        %1179 = vmatprep.subr.mxu0 0.0
        %1180 = vmatpush1.xpose.msra.mxu0 0.0
        %1181 = vmatprep.subr.mxu0 0.0
        %1182 = vmatpush1.xpose.msra.mxu0 0.0
        %1183 = vmatprep.subr.mxu0 0.0
        %1184 = vmatpush1.xpose.msra.mxu0 0.0
        %1185 = vmatprep.subr.mxu0 0.0
        %1186 = vmatpush1.xpose.msra.mxu0 0.0
        %1187 = vmatprep.subr.mxu0 0.0
        %1188 = vmatpush1.xpose.msra.mxu0 0.0
        %1189 = vmatprep.subr.mxu0 0.0
        %1190 = vmatpush1.xpose.msra.mxu0 0.0
        %1191 = vmatprep.subr.mxu0 0.0
        %1192 = vmatpush1.xpose.msra.mxu0 0.0
        %1193 = vmatprep.subr.mxu0 0.0
        %1194 = vmatpush1.xpose.msra.mxu0 0.0
        %1195 = vmatprep.subr.mxu0 0.0
        %1196 = vmatpush1.xpose.msra.mxu0 0.0
        %1197 = vmatprep.mubr.f32.mxu0 0.0
        %1198 = vmatmul.mubr.f32.gmra.mrb[0].mxu0 %v1125
        %v1199 = vpop.f32.mrb[0].mxu0
        %v1200 = vadd.f32 0.0, %v1199
        %v1201 = vpop.f32.mrb[0].mxu0
        %1202 = vmatprep.mubr.f32.mxu0 0.0
        %1203 = vmatmul.mubr.f32.gmra.mrb[0].mxu0 %v1127
        %v1204 = vpop.f32.mrb[0].mxu0
        %v1205 = vadd.f32 0.0, %v1204
        %v1206 = vpop.f32.mrb[0].mxu0
        %1207 = vdwg.mxu0
        %v1208 = vsel %vm1005, %v1200, -inf
        %1209 = vmax.xlane.f32.xlu0 %v1208
        %v1210 = vpop.xlane.xlu0 %1209
        %v1211 = vsel %vm1005, %v1205, -inf
        %1212 = vmax.xlane.f32.xlu0 %v1211
        %v1213 = vpop.xlane.xlu0 %1212
        %v1214 = vsub.f32 %v1200, %v1210
        %v1215 = vsub.f32 %v1205, %v1213
        %v1216 = vmul.f32 %v1214, 1.442695
        %v1217 = vpow.pop %v1216
        %v1218 = vmul.f32 %v1215, 1.442695
        %v1219 = vpow.pop %v1218
        %v1220 = vsel %vm1005, %v1217, 0.0
        %1221 = vadd.xlane.f32.xlu0 %v1220
        %v1222 = vpop.xlane.xlu0 %1221
        %v1223 = vsel %vm1005, %v1219, 0.0
        %1224 = vadd.xlane.f32.xlu0 %v1223
        %v1225 = vpop.xlane.xlu0 %1224
        %v1226 = vrcp.pop %v1222
        %v1227 = vrcp.pop %v1225
        %v1228 = vmul.f32 %v1217, %v1226
        %v1229 = vmul.f32 %v1219, %v1227
        %v1230 = vld [vmem:[#allocation4] sm:$0xff]
        %v1231 = vld [vmem:[#allocation4 + $0x8] sm:$0xff]
        %1234 = vrot.lane.b32.xlu0 %v1230, 120
        %v1235 = vpop.permute.xlu0 %1234
        %1236 = vrot.lane.b32.xlu0 %v1231, 120
        %v1237 = vpop.permute.xlu0 %1236
        %v1241 = vsel %vm1005, %v1228, 0
        %v1244 = vsel %vm1005, %v1229, 0
        %1246 = vmatprep.subr.mxu0 0.0
        %1247 = vmatpush1.msra.mxu0 %v1235
        %1248 = vmatprep.subr.mxu0 0.0
        %1249 = vmatpush1.msra.mxu0 %v1237
        %1250 = vmatprep.subr.mxu0 0.0
        %1251 = vmatpush1.msra.mxu0 0.0
        %1252 = vmatprep.subr.mxu0 0.0
        %1253 = vmatpush1.msra.mxu0 0.0
        %1254 = vmatprep.subr.mxu0 0.0
        %1255 = vmatpush1.msra.mxu0 0.0
        %1256 = vmatprep.subr.mxu0 0.0
        %1257 = vmatpush1.msra.mxu0 0.0
        %1258 = vmatprep.subr.mxu0 0.0
        %1259 = vmatpush1.msra.mxu0 0.0
        %1260 = vmatprep.subr.mxu0 0.0
        %1261 = vmatpush1.msra.mxu0 0.0
        %1262 = vmatprep.subr.mxu0 0.0
        %1263 = vmatpush1.msra.mxu0 0.0
        %1264 = vmatprep.subr.mxu0 0.0
        %1265 = vmatpush1.msra.mxu0 0.0
        %1266 = vmatprep.subr.mxu0 0.0
        %1267 = vmatpush1.msra.mxu0 0.0
        %1268 = vmatprep.subr.mxu0 0.0
        %1269 = vmatpush1.msra.mxu0 0.0
        %1270 = vmatprep.subr.mxu0 0.0
        %1271 = vmatpush1.msra.mxu0 0.0
        %1272 = vmatprep.subr.mxu0 0.0
        %1273 = vmatpush1.msra.mxu0 0.0
        %1274 = vmatprep.subr.mxu0 0.0
        %1275 = vmatpush1.msra.mxu0 0.0
        %1276 = vmatprep.subr.mxu0 0.0
        %1277 = vmatpush1.msra.mxu0 0.0
        %1278 = vmatprep.subr.mxu0 0.0
        %1279 = vmatpush1.msra.mxu0 0.0
        %1280 = vmatprep.subr.mxu0 0.0
        %1281 = vmatpush1.msra.mxu0 0.0
        %1282 = vmatprep.subr.mxu0 0.0
        %1283 = vmatpush1.msra.mxu0 0.0
        %1284 = vmatprep.subr.mxu0 0.0
        %1285 = vmatpush1.msra.mxu0 0.0
        %1286 = vmatprep.subr.mxu0 0.0
        %1287 = vmatpush1.msra.mxu0 0.0
        %1288 = vmatprep.subr.mxu0 0.0
        %1289 = vmatpush1.msra.mxu0 0.0
        %1290 = vmatprep.subr.mxu0 0.0
        %1291 = vmatpush1.msra.mxu0 0.0
        %1292 = vmatprep.subr.mxu0 0.0
        %1293 = vmatpush1.msra.mxu0 0.0
        %1294 = vmatprep.subr.mxu0 0.0
        %1295 = vmatpush1.msra.mxu0 0.0
        %1296 = vmatprep.subr.mxu0 0.0
        %1297 = vmatpush1.msra.mxu0 0.0
        %1298 = vmatprep.subr.mxu0 0.0
        %1299 = vmatpush1.msra.mxu0 0.0
        %1300 = vmatprep.subr.mxu0 0.0
        %1301 = vmatpush1.msra.mxu0 0.0
        %1302 = vmatprep.subr.mxu0 0.0
        %1303 = vmatpush1.msra.mxu0 0.0
        %1304 = vmatprep.subr.mxu0 0.0
        %1305 = vmatpush1.msra.mxu0 0.0
        %1306 = vmatprep.subr.mxu0 0.0
        %1307 = vmatpush1.msra.mxu0 0.0
        %1308 = vmatprep.subr.mxu0 0.0
        %1309 = vmatpush1.msra.mxu0 0.0
        %1310 = vmatprep.mubr.f32.mxu0 0.0
        %1311 = vmatmul.mubr.f32.gmra.mrb[0].mxu0 %v1241
        %v1312 = vpop.f32.mrb[0].mxu0
        %v1313 = vadd.f32 0.0, %v1312
        %v1314 = vpop.f32.mrb[0].mxu0
        %1315 = vmatprep.mubr.f32.mxu0 0.0
        %1316 = vmatmul.mubr.f32.gmra.mrb[0].mxu0 %v1244
        %v1317 = vpop.f32.mrb[0].mxu0
        %v1318 = vadd.f32 0.0, %v1317
        %v1319 = vpop.f32.mrb[0].mxu0
        %1320 = vdwg.mxu0
        %1323 = vrot.lane.b32.xlu0 %v1313, 8
        %v1324 = vpop.permute.xlu0 %1323
        %1325 = vrot.lane.b32.xlu0 %v1318, 8
        %v1326 = vpop.permute.xlu0 %1325
        %vm1329 = vcmask 130112
        %1330 = vst.msk [vmem:[#allocation5] sm:$0xff] %vm1329, %v1324
        %1331 = vst.msk [vmem:[#allocation5 + $0x8] sm:$0xff] %vm1329, %v1326
        %v1332 = vld [vmem:[#allocation3] sm:$0xff]
        %v1333 = vld [vmem:[#allocation3 + $0x8] sm:$0xff]
        %1334 = vrot.lane.b32.xlu0 %v913, 112
        %v1335 = vpop.permute.xlu0 %1334
        %1336 = vrot.lane.b32.xlu0 %v914, 112
        %v1337 = vpop.permute.xlu0 %1336
        %1340 = vrot.lane.b32.xlu0 %v1332, 112
        %v1341 = vpop.permute.xlu0 %1340
        %1342 = vrot.lane.b32.xlu0 %v1333, 112
        %v1343 = vpop.permute.xlu0 %1342
        %v1344 = vsel %vm917, %v1335, 0
        %v1346 = vsel %vm917, %v1337, 0
        %v1348 = vsel %vm917, %v1341, 0
        %v1350 = vsel %vm917, %v1343, 0
        %1352 = vmatprep.subr.mxu0 0.0
        %1353 = vmatpush1.xpose.msra.mxu0 %v1348
        %1354 = vmatprep.subr.mxu0 0.0
        %1355 = vmatpush1.xpose.msra.mxu0 %v1350
        %1356 = vmatprep.subr.mxu0 0.0
        %1357 = vmatpush1.xpose.msra.mxu0 0.0
        %1358 = vmatprep.subr.mxu0 0.0
        %1359 = vmatpush1.xpose.msra.mxu0 0.0
        %1360 = vmatprep.subr.mxu0 0.0
        %1361 = vmatpush1.xpose.msra.mxu0 0.0
        %1362 = vmatprep.subr.mxu0 0.0
        %1363 = vmatpush1.xpose.msra.mxu0 0.0
        %1364 = vmatprep.subr.mxu0 0.0
        %1365 = vmatpush1.xpose.msra.mxu0 0.0
        %1366 = vmatprep.subr.mxu0 0.0
        %1367 = vmatpush1.xpose.msra.mxu0 0.0
        %1368 = vmatprep.subr.mxu0 0.0
        %1369 = vmatpush1.xpose.msra.mxu0 0.0
        %1370 = vmatprep.subr.mxu0 0.0
        %1371 = vmatpush1.xpose.msra.mxu0 0.0
        %1372 = vmatprep.subr.mxu0 0.0
        %1373 = vmatpush1.xpose.msra.mxu0 0.0
        %1374 = vmatprep.subr.mxu0 0.0
        %1375 = vmatpush1.xpose.msra.mxu0 0.0
        %1376 = vmatprep.subr.mxu0 0.0
        %1377 = vmatpush1.xpose.msra.mxu0 0.0
        %1378 = vmatprep.subr.mxu0 0.0
        %1379 = vmatpush1.xpose.msra.mxu0 0.0
        %1380 = vmatprep.subr.mxu0 0.0
        %1381 = vmatpush1.xpose.msra.mxu0 0.0
        %1382 = vmatprep.subr.mxu0 0.0
        %1383 = vmatpush1.xpose.msra.mxu0 0.0
        %1384 = vmatprep.subr.mxu0 0.0
        %1385 = vmatpush1.xpose.msra.mxu0 0.0
        %1386 = vmatprep.subr.mxu0 0.0
        %1387 = vmatpush1.xpose.msra.mxu0 0.0
        %1388 = vmatprep.subr.mxu0 0.0
        %1389 = vmatpush1.xpose.msra.mxu0 0.0
        %1390 = vmatprep.subr.mxu0 0.0
        %1391 = vmatpush1.xpose.msra.mxu0 0.0
        %1392 = vmatprep.subr.mxu0 0.0
        %1393 = vmatpush1.xpose.msra.mxu0 0.0
        %1394 = vmatprep.subr.mxu0 0.0
        %1395 = vmatpush1.xpose.msra.mxu0 0.0
        %1396 = vmatprep.subr.mxu0 0.0
        %1397 = vmatpush1.xpose.msra.mxu0 0.0
        %1398 = vmatprep.subr.mxu0 0.0
        %1399 = vmatpush1.xpose.msra.mxu0 0.0
        %1400 = vmatprep.subr.mxu0 0.0
        %1401 = vmatpush1.xpose.msra.mxu0 0.0
        %1402 = vmatprep.subr.mxu0 0.0
        %1403 = vmatpush1.xpose.msra.mxu0 0.0
        %1404 = vmatprep.subr.mxu0 0.0
        %1405 = vmatpush1.xpose.msra.mxu0 0.0
        %1406 = vmatprep.subr.mxu0 0.0
        %1407 = vmatpush1.xpose.msra.mxu0 0.0
        %1408 = vmatprep.subr.mxu0 0.0
        %1409 = vmatpush1.xpose.msra.mxu0 0.0
        %1410 = vmatprep.subr.mxu0 0.0
        %1411 = vmatpush1.xpose.msra.mxu0 0.0
        %1412 = vmatprep.subr.mxu0 0.0
        %1413 = vmatpush1.xpose.msra.mxu0 0.0
        %1414 = vmatprep.subr.mxu0 0.0
        %1415 = vmatpush1.xpose.msra.mxu0 0.0
        %1416 = vmatprep.mubr.f32.mxu0 0.0
        %1417 = vmatmul.mubr.f32.gmra.mrb[0].mxu0 %v1344
        %v1418 = vpop.f32.mrb[0].mxu0
        %v1419 = vadd.f32 0.0, %v1418
        %v1420 = vpop.f32.mrb[0].mxu0
        %1421 = vmatprep.mubr.f32.mxu0 0.0
        %1422 = vmatmul.mubr.f32.gmra.mrb[0].mxu0 %v1346
        %v1423 = vpop.f32.mrb[0].mxu0
        %v1424 = vadd.f32 0.0, %v1423
        %v1425 = vpop.f32.mrb[0].mxu0
        %1426 = vdwg.mxu0
        %v1427 = vsel %vm1005, %v1419, -inf
        %1428 = vmax.xlane.f32.xlu0 %v1427
        %v1429 = vpop.xlane.xlu0 %1428
        %v1430 = vsel %vm1005, %v1424, -inf
        %1431 = vmax.xlane.f32.xlu0 %v1430
        %v1432 = vpop.xlane.xlu0 %1431
        %v1433 = vsub.f32 %v1419, %v1429
        %v1434 = vsub.f32 %v1424, %v1432
        %v1435 = vmul.f32 %v1433, 1.442695
        %v1436 = vpow.pop %v1435
        %v1437 = vmul.f32 %v1434, 1.442695
        %v1438 = vpow.pop %v1437
        %v1439 = vsel %vm1005, %v1436, 0.0
        %1440 = vadd.xlane.f32.xlu0 %v1439
        %v1441 = vpop.xlane.xlu0 %1440
        %v1442 = vsel %vm1005, %v1438, 0.0
        %1443 = vadd.xlane.f32.xlu0 %v1442
        %v1444 = vpop.xlane.xlu0 %1443
        %v1445 = vrcp.pop %v1441
        %v1446 = vrcp.pop %v1444
        %v1447 = vmul.f32 %v1436, %v1445
        %v1448 = vmul.f32 %v1438, %v1446
        %v1449 = vld [vmem:[#allocation4] sm:$0xff]
        %v1450 = vld [vmem:[#allocation4 + $0x8] sm:$0xff]
        %1453 = vrot.lane.b32.xlu0 %v1449, 112
        %v1454 = vpop.permute.xlu0 %1453
        %1455 = vrot.lane.b32.xlu0 %v1450, 112
        %v1456 = vpop.permute.xlu0 %1455
        %v1460 = vsel %vm1005, %v1447, 0
        %v1463 = vsel %vm1005, %v1448, 0
        %1465 = vmatprep.subr.mxu0 0.0
        %1466 = vmatpush1.msra.mxu0 %v1454
        %1467 = vmatprep.subr.mxu0 0.0
        %1468 = vmatpush1.msra.mxu0 %v1456
        %1469 = vmatprep.subr.mxu0 0.0
        %1470 = vmatpush1.msra.mxu0 0.0
        %1471 = vmatprep.subr.mxu0 0.0
        %1472 = vmatpush1.msra.mxu0 0.0
        %1473 = vmatprep.subr.mxu0 0.0
        %1474 = vmatpush1.msra.mxu0 0.0
        %1475 = vmatprep.subr.mxu0 0.0
        %1476 = vmatpush1.msra.mxu0 0.0
        %1477 = vmatprep.subr.mxu0 0.0
        %1478 = vmatpush1.msra.mxu0 0.0
        %1479 = vmatprep.subr.mxu0 0.0
        %1480 = vmatpush1.msra.mxu0 0.0
        %1481 = vmatprep.subr.mxu0 0.0
        %1482 = vmatpush1.msra.mxu0 0.0
        %1483 = vmatprep.subr.mxu0 0.0
        %1484 = vmatpush1.msra.mxu0 0.0
        %1485 = vmatprep.subr.mxu0 0.0
        %1486 = vmatpush1.msra.mxu0 0.0
        %1487 = vmatprep.subr.mxu0 0.0
        %1488 = vmatpush1.msra.mxu0 0.0
        %1489 = vmatprep.subr.mxu0 0.0
        %1490 = vmatpush1.msra.mxu0 0.0
        %1491 = vmatprep.subr.mxu0 0.0
        %1492 = vmatpush1.msra.mxu0 0.0
        %1493 = vmatprep.subr.mxu0 0.0
        %1494 = vmatpush1.msra.mxu0 0.0
        %1495 = vmatprep.subr.mxu0 0.0
        %1496 = vmatpush1.msra.mxu0 0.0
        %1497 = vmatprep.subr.mxu0 0.0
        %1498 = vmatpush1.msra.mxu0 0.0
        %1499 = vmatprep.subr.mxu0 0.0
        %1500 = vmatpush1.msra.mxu0 0.0
        %1501 = vmatprep.subr.mxu0 0.0
        %1502 = vmatpush1.msra.mxu0 0.0
        %1503 = vmatprep.subr.mxu0 0.0
        %1504 = vmatpush1.msra.mxu0 0.0
        %1505 = vmatprep.subr.mxu0 0.0
        %1506 = vmatpush1.msra.mxu0 0.0
        %1507 = vmatprep.subr.mxu0 0.0
        %1508 = vmatpush1.msra.mxu0 0.0
        %1509 = vmatprep.subr.mxu0 0.0
        %1510 = vmatpush1.msra.mxu0 0.0
        %1511 = vmatprep.subr.mxu0 0.0
        %1512 = vmatpush1.msra.mxu0 0.0
        %1513 = vmatprep.subr.mxu0 0.0
        %1514 = vmatpush1.msra.mxu0 0.0
        %1515 = vmatprep.subr.mxu0 0.0
        %1516 = vmatpush1.msra.mxu0 0.0
        %1517 = vmatprep.subr.mxu0 0.0
        %1518 = vmatpush1.msra.mxu0 0.0
        %1519 = vmatprep.subr.mxu0 0.0
        %1520 = vmatpush1.msra.mxu0 0.0
        %1521 = vmatprep.subr.mxu0 0.0
        %1522 = vmatpush1.msra.mxu0 0.0
        %1523 = vmatprep.subr.mxu0 0.0
        %1524 = vmatpush1.msra.mxu0 0.0
        %1525 = vmatprep.subr.mxu0 0.0
        %1526 = vmatpush1.msra.mxu0 0.0
        %1527 = vmatprep.subr.mxu0 0.0
        %1528 = vmatpush1.msra.mxu0 0.0
        %1529 = vmatprep.mubr.f32.mxu0 0.0
        %1530 = vmatmul.mubr.f32.gmra.mrb[0].mxu0 %v1460
        %v1531 = vpop.f32.mrb[0].mxu0
        %v1532 = vadd.f32 0.0, %v1531
        %v1533 = vpop.f32.mrb[0].mxu0
        %1534 = vmatprep.mubr.f32.mxu0 0.0
        %1535 = vmatmul.mubr.f32.gmra.mrb[0].mxu0 %v1463
        %v1536 = vpop.f32.mrb[0].mxu0
        %v1537 = vadd.f32 0.0, %v1536
        %v1538 = vpop.f32.mrb[0].mxu0
        %1539 = vdwg.mxu0
        %1542 = vrot.lane.b32.xlu0 %v1532, 16
        %v1543 = vpop.permute.xlu0 %1542
        %1544 = vrot.lane.b32.xlu0 %v1537, 16
        %v1545 = vpop.permute.xlu0 %1544
        %vm1548 = vcmask 195712
        %1549 = vst.msk [vmem:[#allocation5] sm:$0xff] %vm1548, %v1543
        %1550 = vst.msk [vmem:[#allocation5 + $0x8] sm:$0xff] %vm1548, %v1545
        %v1551 = vld [vmem:[#allocation3] sm:$0xff]
        %v1552 = vld [vmem:[#allocation3 + $0x8] sm:$0xff]
        %1553 = vrot.lane.b32.xlu0 %v913, 104
        %v1554 = vpop.permute.xlu0 %1553
        %1555 = vrot.lane.b32.xlu0 %v914, 104
        %v1556 = vpop.permute.xlu0 %1555
        %1559 = vrot.lane.b32.xlu0 %v1551, 104
        %v1560 = vpop.permute.xlu0 %1559
        %1561 = vrot.lane.b32.xlu0 %v1552, 104
        %v1562 = vpop.permute.xlu0 %1561
        %v1563 = vsel %vm917, %v1554, 0
        %v1565 = vsel %vm917, %v1556, 0
        %v1567 = vsel %vm917, %v1560, 0
        %v1569 = vsel %vm917, %v1562, 0
        %1571 = vmatprep.subr.mxu0 0.0
        %1572 = vmatpush1.xpose.msra.mxu0 %v1567
        %1573 = vmatprep.subr.mxu0 0.0
        %1574 = vmatpush1.xpose.msra.mxu0 %v1569
        %1575 = vmatprep.subr.mxu0 0.0
        %1576 = vmatpush1.xpose.msra.mxu0 0.0
        %1577 = vmatprep.subr.mxu0 0.0
        %1578 = vmatpush1.xpose.msra.mxu0 0.0
        %1579 = vmatprep.subr.mxu0 0.0
        %1580 = vmatpush1.xpose.msra.mxu0 0.0
        %1581 = vmatprep.subr.mxu0 0.0
        %1582 = vmatpush1.xpose.msra.mxu0 0.0
        %1583 = vmatprep.subr.mxu0 0.0
        %1584 = vmatpush1.xpose.msra.mxu0 0.0
        %1585 = vmatprep.subr.mxu0 0.0
        %1586 = vmatpush1.xpose.msra.mxu0 0.0
        %1587 = vmatprep.subr.mxu0 0.0
        %1588 = vmatpush1.xpose.msra.mxu0 0.0
        %1589 = vmatprep.subr.mxu0 0.0
        %1590 = vmatpush1.xpose.msra.mxu0 0.0
        %1591 = vmatprep.subr.mxu0 0.0
        %1592 = vmatpush1.xpose.msra.mxu0 0.0
        %1593 = vmatprep.subr.mxu0 0.0
        %1594 = vmatpush1.xpose.msra.mxu0 0.0
        %1595 = vmatprep.subr.mxu0 0.0
        %1596 = vmatpush1.xpose.msra.mxu0 0.0
        %1597 = vmatprep.subr.mxu0 0.0
        %1598 = vmatpush1.xpose.msra.mxu0 0.0
        %1599 = vmatprep.subr.mxu0 0.0
        %1600 = vmatpush1.xpose.msra.mxu0 0.0
        %1601 = vmatprep.subr.mxu0 0.0
        %1602 = vmatpush1.xpose.msra.mxu0 0.0
        %1603 = vmatprep.subr.mxu0 0.0
        %1604 = vmatpush1.xpose.msra.mxu0 0.0
        %1605 = vmatprep.subr.mxu0 0.0
        %1606 = vmatpush1.xpose.msra.mxu0 0.0
        %1607 = vmatprep.subr.mxu0 0.0
        %1608 = vmatpush1.xpose.msra.mxu0 0.0
        %1609 = vmatprep.subr.mxu0 0.0
        %1610 = vmatpush1.xpose.msra.mxu0 0.0
        %1611 = vmatprep.subr.mxu0 0.0
        %1612 = vmatpush1.xpose.msra.mxu0 0.0
        %1613 = vmatprep.subr.mxu0 0.0
        %1614 = vmatpush1.xpose.msra.mxu0 0.0
        %1615 = vmatprep.subr.mxu0 0.0
        %1616 = vmatpush1.xpose.msra.mxu0 0.0
        %1617 = vmatprep.subr.mxu0 0.0
        %1618 = vmatpush1.xpose.msra.mxu0 0.0
        %1619 = vmatprep.subr.mxu0 0.0
        %1620 = vmatpush1.xpose.msra.mxu0 0.0
        %1621 = vmatprep.subr.mxu0 0.0
        %1622 = vmatpush1.xpose.msra.mxu0 0.0
        %1623 = vmatprep.subr.mxu0 0.0
        %1624 = vmatpush1.xpose.msra.mxu0 0.0
        %1625 = vmatprep.subr.mxu0 0.0
        %1626 = vmatpush1.xpose.msra.mxu0 0.0
        %1627 = vmatprep.subr.mxu0 0.0
        %1628 = vmatpush1.xpose.msra.mxu0 0.0
        %1629 = vmatprep.subr.mxu0 0.0
        %1630 = vmatpush1.xpose.msra.mxu0 0.0
        %1631 = vmatprep.subr.mxu0 0.0
        %1632 = vmatpush1.xpose.msra.mxu0 0.0
        %1633 = vmatprep.subr.mxu0 0.0
        %1634 = vmatpush1.xpose.msra.mxu0 0.0
        %1635 = vmatprep.mubr.f32.mxu0 0.0
        %1636 = vmatmul.mubr.f32.gmra.mrb[0].mxu0 %v1563
        %v1637 = vpop.f32.mrb[0].mxu0
        %v1638 = vadd.f32 0.0, %v1637
        %v1639 = vpop.f32.mrb[0].mxu0
        %1640 = vmatprep.mubr.f32.mxu0 0.0
        %1641 = vmatmul.mubr.f32.gmra.mrb[0].mxu0 %v1565
        %v1642 = vpop.f32.mrb[0].mxu0
        %v1643 = vadd.f32 0.0, %v1642
        %v1644 = vpop.f32.mrb[0].mxu0
        %1645 = vdwg.mxu0
        %v1646 = vsel %vm1005, %v1638, -inf
        %1647 = vmax.xlane.f32.xlu0 %v1646
        %v1648 = vpop.xlane.xlu0 %1647
        %v1649 = vsel %vm1005, %v1643, -inf
        %1650 = vmax.xlane.f32.xlu0 %v1649
        %v1651 = vpop.xlane.xlu0 %1650
        %v1652 = vsub.f32 %v1638, %v1648
        %v1653 = vsub.f32 %v1643, %v1651
        %v1654 = vmul.f32 %v1652, 1.442695
        %v1655 = vpow.pop %v1654
        %v1656 = vmul.f32 %v1653, 1.442695
        %v1657 = vpow.pop %v1656
        %v1658 = vsel %vm1005, %v1655, 0.0
        %1659 = vadd.xlane.f32.xlu0 %v1658
        %v1660 = vpop.xlane.xlu0 %1659
        %v1661 = vsel %vm1005, %v1657, 0.0
        %1662 = vadd.xlane.f32.xlu0 %v1661
        %v1663 = vpop.xlane.xlu0 %1662
        %v1664 = vrcp.pop %v1660
        %v1665 = vrcp.pop %v1663
        %v1666 = vmul.f32 %v1655, %v1664
        %v1667 = vmul.f32 %v1657, %v1665
        %v1668 = vld [vmem:[#allocation4] sm:$0xff]
        %v1669 = vld [vmem:[#allocation4 + $0x8] sm:$0xff]
        %1672 = vrot.lane.b32.xlu0 %v1668, 104
        %v1673 = vpop.permute.xlu0 %1672
        %1674 = vrot.lane.b32.xlu0 %v1669, 104
        %v1675 = vpop.permute.xlu0 %1674
        %v1679 = vsel %vm1005, %v1666, 0
        %v1682 = vsel %vm1005, %v1667, 0
        %1684 = vmatprep.subr.mxu0 0.0
        %1685 = vmatpush1.msra.mxu0 %v1673
        %1686 = vmatprep.subr.mxu0 0.0
        %1687 = vmatpush1.msra.mxu0 %v1675
        %1688 = vmatprep.subr.mxu0 0.0
        %1689 = vmatpush1.msra.mxu0 0.0
        %1690 = vmatprep.subr.mxu0 0.0
        %1691 = vmatpush1.msra.mxu0 0.0
        %1692 = vmatprep.subr.mxu0 0.0
        %1693 = vmatpush1.msra.mxu0 0.0
        %1694 = vmatprep.subr.mxu0 0.0
        %1695 = vmatpush1.msra.mxu0 0.0
        %1696 = vmatprep.subr.mxu0 0.0
        %1697 = vmatpush1.msra.mxu0 0.0
        %1698 = vmatprep.subr.mxu0 0.0
        %1699 = vmatpush1.msra.mxu0 0.0
        %1700 = vmatprep.subr.mxu0 0.0
        %1701 = vmatpush1.msra.mxu0 0.0
        %1702 = vmatprep.subr.mxu0 0.0
        %1703 = vmatpush1.msra.mxu0 0.0
        %1704 = vmatprep.subr.mxu0 0.0
        %1705 = vmatpush1.msra.mxu0 0.0
        %1706 = vmatprep.subr.mxu0 0.0
        %1707 = vmatpush1.msra.mxu0 0.0
        %1708 = vmatprep.subr.mxu0 0.0
        %1709 = vmatpush1.msra.mxu0 0.0
        %1710 = vmatprep.subr.mxu0 0.0
        %1711 = vmatpush1.msra.mxu0 0.0
        %1712 = vmatprep.subr.mxu0 0.0
        %1713 = vmatpush1.msra.mxu0 0.0
        %1714 = vmatprep.subr.mxu0 0.0
        %1715 = vmatpush1.msra.mxu0 0.0
        %1716 = vmatprep.subr.mxu0 0.0
        %1717 = vmatpush1.msra.mxu0 0.0
        %1718 = vmatprep.subr.mxu0 0.0
        %1719 = vmatpush1.msra.mxu0 0.0
        %1720 = vmatprep.subr.mxu0 0.0
        %1721 = vmatpush1.msra.mxu0 0.0
        %1722 = vmatprep.subr.mxu0 0.0
        %1723 = vmatpush1.msra.mxu0 0.0
        %1724 = vmatprep.subr.mxu0 0.0
        %1725 = vmatpush1.msra.mxu0 0.0
        %1726 = vmatprep.subr.mxu0 0.0
        %1727 = vmatpush1.msra.mxu0 0.0
        %1728 = vmatprep.subr.mxu0 0.0
        %1729 = vmatpush1.msra.mxu0 0.0
        %1730 = vmatprep.subr.mxu0 0.0
        %1731 = vmatpush1.msra.mxu0 0.0
        %1732 = vmatprep.subr.mxu0 0.0
        %1733 = vmatpush1.msra.mxu0 0.0
        %1734 = vmatprep.subr.mxu0 0.0
        %1735 = vmatpush1.msra.mxu0 0.0
        %1736 = vmatprep.subr.mxu0 0.0
        %1737 = vmatpush1.msra.mxu0 0.0
        %1738 = vmatprep.subr.mxu0 0.0
        %1739 = vmatpush1.msra.mxu0 0.0
        %1740 = vmatprep.subr.mxu0 0.0
        %1741 = vmatpush1.msra.mxu0 0.0
        %1742 = vmatprep.subr.mxu0 0.0
        %1743 = vmatpush1.msra.mxu0 0.0
        %1744 = vmatprep.subr.mxu0 0.0
        %1745 = vmatpush1.msra.mxu0 0.0
        %1746 = vmatprep.subr.mxu0 0.0
        %1747 = vmatpush1.msra.mxu0 0.0
        %1748 = vmatprep.mubr.f32.mxu0 0.0
        %1749 = vmatmul.mubr.f32.gmra.mrb[0].mxu0 %v1679
        %v1750 = vpop.f32.mrb[0].mxu0
        %v1751 = vadd.f32 0.0, %v1750
        %v1752 = vpop.f32.mrb[0].mxu0
        %1753 = vmatprep.mubr.f32.mxu0 0.0
        %1754 = vmatmul.mubr.f32.gmra.mrb[0].mxu0 %v1682
        %v1755 = vpop.f32.mrb[0].mxu0
        %v1756 = vadd.f32 0.0, %v1755
        %v1757 = vpop.f32.mrb[0].mxu0
        %1758 = vdwg.mxu0
        %1761 = vrot.lane.b32.xlu0 %v1751, 24
        %v1762 = vpop.permute.xlu0 %1761
        %1763 = vrot.lane.b32.xlu0 %v1756, 24
        %v1764 = vpop.permute.xlu0 %1763
        %vm1767 = vcmask 261312
        %1768 = vst.msk [vmem:[#allocation5] sm:$0xff] %vm1767, %v1762
        %1769 = vst.msk [vmem:[#allocation5 + $0x8] sm:$0xff] %vm1767, %v1764
        %v1770 = vld [vmem:[#allocation5] sm:$0xff]
        %v1771 = vld [vmem:[#allocation5 + $0x8] sm:$0xff]
        %v1772 = vld [vmem:[%s9] sm:$0xff]
        %v1773 = vld [vmem:[%s9 + $0x8] sm:$0xff]
        %v1774 = vld [vmem:[%s9 + $0x10] sm:$0xff]
        %v1775 = vld [vmem:[%s9 + $0x18] sm:$0xff]
        %v1776 = vld [vmem:[%s10] sm:$0x1]
        %v1778 = vlaneseq
        %v1779 = vshrl.u32 %v1778, 7
        %v1780 = vsub.s32 0, %v1779
        %v1781 = vrot.slane %v1776, %v1780
        %v1784 = vsel %vm831, %v1770, 0
        %v1787 = vsel %vm831, %v1771, 0
        %1789 = vmatprep.subr.mxu0 0.0
        %1790 = vmatpush1.msra.mxu0 %v1772
        %1791 = vmatprep.subr.mxu0 0.0
        %1792 = vmatpush1.msra.mxu0 %v1773
        %1793 = vmatprep.subr.mxu0 0.0
        %1794 = vmatpush1.msra.mxu0 %v1774
        %1795 = vmatprep.subr.mxu0 0.0
        %1796 = vmatpush1.msra.mxu0 %v1775
        %1797 = vmatprep.subr.mxu0 0.0
        %1798 = vmatpush1.msra.mxu0 0.0
        %1799 = vmatprep.subr.mxu0 0.0
        %1800 = vmatpush1.msra.mxu0 0.0
        %1801 = vmatprep.subr.mxu0 0.0
        %1802 = vmatpush1.msra.mxu0 0.0
        %1803 = vmatprep.subr.mxu0 0.0
        %1804 = vmatpush1.msra.mxu0 0.0
        %1805 = vmatprep.subr.mxu0 0.0
        %1806 = vmatpush1.msra.mxu0 0.0
        %1807 = vmatprep.subr.mxu0 0.0
        %1808 = vmatpush1.msra.mxu0 0.0
        %1809 = vmatprep.subr.mxu0 0.0
        %1810 = vmatpush1.msra.mxu0 0.0
        %1811 = vmatprep.subr.mxu0 0.0
        %1812 = vmatpush1.msra.mxu0 0.0
        %1813 = vmatprep.subr.mxu0 0.0
        %1814 = vmatpush1.msra.mxu0 0.0
        %1815 = vmatprep.subr.mxu0 0.0
        %1816 = vmatpush1.msra.mxu0 0.0
        %1817 = vmatprep.subr.mxu0 0.0
        %1818 = vmatpush1.msra.mxu0 0.0
        %1819 = vmatprep.subr.mxu0 0.0
        %1820 = vmatpush1.msra.mxu0 0.0
        %1821 = vmatprep.subr.mxu0 0.0
        %1822 = vmatpush1.msra.mxu0 0.0
        %1823 = vmatprep.subr.mxu0 0.0
        %1824 = vmatpush1.msra.mxu0 0.0
        %1825 = vmatprep.subr.mxu0 0.0
        %1826 = vmatpush1.msra.mxu0 0.0
        %1827 = vmatprep.subr.mxu0 0.0
        %1828 = vmatpush1.msra.mxu0 0.0
        %1829 = vmatprep.subr.mxu0 0.0
        %1830 = vmatpush1.msra.mxu0 0.0
        %1831 = vmatprep.subr.mxu0 0.0
        %1832 = vmatpush1.msra.mxu0 0.0
        %1833 = vmatprep.subr.mxu0 0.0
        %1834 = vmatpush1.msra.mxu0 0.0
        %1835 = vmatprep.subr.mxu0 0.0
        %1836 = vmatpush1.msra.mxu0 0.0
        %1837 = vmatprep.subr.mxu0 0.0
        %1838 = vmatpush1.msra.mxu0 0.0
        %1839 = vmatprep.subr.mxu0 0.0
        %1840 = vmatpush1.msra.mxu0 0.0
        %1841 = vmatprep.subr.mxu0 0.0
        %1842 = vmatpush1.msra.mxu0 0.0
        %1843 = vmatprep.subr.mxu0 0.0
        %1844 = vmatpush1.msra.mxu0 0.0
        %1845 = vmatprep.subr.mxu0 0.0
        %1846 = vmatpush1.msra.mxu0 0.0
        %1847 = vmatprep.subr.mxu0 0.0
        %1848 = vmatpush1.msra.mxu0 0.0
        %1849 = vmatprep.subr.mxu0 0.0
        %1850 = vmatpush1.msra.mxu0 0.0
        %1851 = vmatprep.subr.mxu0 0.0
        %1852 = vmatpush1.msra.mxu0 0.0
        %1853 = vmatprep.mubr.f32.mxu0 0.0
        %1854 = vmatmul.mubr.f32.gmra.mrb[0].mxu0 %v1784
        %v1855 = vpop.f32.mrb[0].mxu0
        %v1856 = vadd.f32 %v1781, %v1855
        %v1857 = vpop.f32.mrb[0].mxu0
        %1858 = vmatprep.mubr.f32.mxu0 0.0
        %1859 = vmatmul.mubr.f32.gmra.mrb[0].mxu0 %v1787
        %v1860 = vpop.f32.mrb[0].mxu0
        %v1861 = vadd.f32 %v1781, %v1860
        %v1862 = vpop.f32.mrb[0].mxu0
        %1863 = vdwg.mxu0
        %v1864 = vadd.f32 %v815, %v1856
        %v1865 = vadd.f32 %v816, %v1861
        %v1866 = vld [vmem:[%s11] sm:$0x1]
        %v1867 = vld [vmem:[%s12] sm:$0x1]
        %v1868 = vsel %vm831, %v1864, 0.0
        %1869 = vadd.xlane.f32.xlu0 %v1868
        %v1870 = vpop.xlane.xlu0 %1869
        %v1871 = vsel %vm831, %v1865, 0.0
        %1872 = vadd.xlane.f32.xlu0 %v1871
        %v1873 = vpop.xlane.xlu0 %1872
        %v1874 = vrcp.pop 32.0
        %v1875 = vmul.f32 %v1870, %v1874
        %v1876 = vmul.f32 %v1873, %v1874
        %v1877 = vsub.f32 %v1864, %v1875
        %v1878 = vsub.f32 %v1865, %v1876
        %v1879 = vmul.f32 %v1877, %v1877
        %v1880 = vmul.f32 %v1878, %v1878
        %v1881 = vsel %vm831, %v1879, 0.0
        %1882 = vadd.xlane.f32.xlu0 %v1881
        %v1883 = vpop.xlane.xlu0 %1882
        %v1884 = vsel %vm831, %v1880, 0.0
        %1885 = vadd.xlane.f32.xlu0 %v1884
        %v1886 = vpop.xlane.xlu0 %1885
        %v1887 = vmul.f32 %v1883, %v1874
        %v1888 = vmul.f32 %v1886, %v1874
        %v1889 = vadd.f32 %v1887, 1e-05
        %v1890 = vadd.f32 %v1888, 1e-05
        %v1891 = vrsqrt.pop %v1889
        %v1892 = vrsqrt.pop %v1890
        %v1893 = vmul.f32 %v1877, %v1891
        %v1894 = vmul.f32 %v1878, %v1892
        %v1896 = vlaneseq
        %v1897 = vshrl.u32 %v1896, 7
        %v1898 = vsub.s32 0, %v1897
        %v1899 = vrot.slane %v1866, %v1898
        %v1901 = vmul.f32 %v1893, %v1899
        %v1902 = vmul.f32 %v1894, %v1899
        %v1904 = vlaneseq
        %v1905 = vshrl.u32 %v1904, 7
        %v1906 = vsub.s32 0, %v1905
        %v1907 = vrot.slane %v1867, %v1906
        %v1909 = vadd.f32 %v1901, %v1907
        %v1910 = vadd.f32 %v1902, %v1907
        %v1911 = vld [vmem:[#allocation6] sm:$0xff]
        %v1912 = vld [vmem:[#allocation6 + $0x8] sm:$0xff]
        %v1913 = vld [vmem:[#allocation6 + $0x10] sm:$0xff]
        %v1914 = vld [vmem:[#allocation6 + $0x18] sm:$0xff]
        %v1915 = vld [vmem:[%s14] sm:$0x1]
        %v1917 = vlaneseq
        %v1918 = vshrl.u32 %v1917, 7
        %v1919 = vsub.s32 0, %v1918
        %v1920 = vrot.slane %v1915, %v1919
        %v1923 = vsel %vm831, %v1909, 0
        %v1926 = vsel %vm831, %v1910, 0
        %1928 = vmatprep.subr.mxu0 0.0
        %1929 = vmatpush1.msra.mxu0 %v1911
        %1930 = vmatprep.subr.mxu0 0.0
        %1931 = vmatpush1.msra.mxu0 %v1912
        %1932 = vmatprep.subr.mxu0 0.0
        %1933 = vmatpush1.msra.mxu0 %v1913
        %1934 = vmatprep.subr.mxu0 0.0
        %1935 = vmatpush1.msra.mxu0 %v1914
        %1936 = vmatprep.subr.mxu0 0.0
        %1937 = vmatpush1.msra.mxu0 0.0
        %1938 = vmatprep.subr.mxu0 0.0
        %1939 = vmatpush1.msra.mxu0 0.0
        %1940 = vmatprep.subr.mxu0 0.0
        %1941 = vmatpush1.msra.mxu0 0.0
        %1942 = vmatprep.subr.mxu0 0.0
        %1943 = vmatpush1.msra.mxu0 0.0
        %1944 = vmatprep.subr.mxu0 0.0
        %1945 = vmatpush1.msra.mxu0 0.0
        %1946 = vmatprep.subr.mxu0 0.0
        %1947 = vmatpush1.msra.mxu0 0.0
        %1948 = vmatprep.subr.mxu0 0.0
        %1949 = vmatpush1.msra.mxu0 0.0
        %1950 = vmatprep.subr.mxu0 0.0
        %1951 = vmatpush1.msra.mxu0 0.0
        %1952 = vmatprep.subr.mxu0 0.0
        %1953 = vmatpush1.msra.mxu0 0.0
        %1954 = vmatprep.subr.mxu0 0.0
        %1955 = vmatpush1.msra.mxu0 0.0
        %1956 = vmatprep.subr.mxu0 0.0
        %1957 = vmatpush1.msra.mxu0 0.0
        %1958 = vmatprep.subr.mxu0 0.0
        %1959 = vmatpush1.msra.mxu0 0.0
        %1960 = vmatprep.subr.mxu0 0.0
        %1961 = vmatpush1.msra.mxu0 0.0
        %1962 = vmatprep.subr.mxu0 0.0
        %1963 = vmatpush1.msra.mxu0 0.0
        %1964 = vmatprep.subr.mxu0 0.0
        %1965 = vmatpush1.msra.mxu0 0.0
        %1966 = vmatprep.subr.mxu0 0.0
        %1967 = vmatpush1.msra.mxu0 0.0
        %1968 = vmatprep.subr.mxu0 0.0
        %1969 = vmatpush1.msra.mxu0 0.0
        %1970 = vmatprep.subr.mxu0 0.0
        %1971 = vmatpush1.msra.mxu0 0.0
        %1972 = vmatprep.subr.mxu0 0.0
        %1973 = vmatpush1.msra.mxu0 0.0
        %1974 = vmatprep.subr.mxu0 0.0
        %1975 = vmatpush1.msra.mxu0 0.0
        %1976 = vmatprep.subr.mxu0 0.0
        %1977 = vmatpush1.msra.mxu0 0.0
        %1978 = vmatprep.subr.mxu0 0.0
        %1979 = vmatpush1.msra.mxu0 0.0
        %1980 = vmatprep.subr.mxu0 0.0
        %1981 = vmatpush1.msra.mxu0 0.0
        %1982 = vmatprep.subr.mxu0 0.0
        %1983 = vmatpush1.msra.mxu0 0.0
        %1984 = vmatprep.subr.mxu0 0.0
        %1985 = vmatpush1.msra.mxu0 0.0
        %1986 = vmatprep.subr.mxu0 0.0
        %1987 = vmatpush1.msra.mxu0 0.0
        %1988 = vmatprep.subr.mxu0 0.0
        %1989 = vmatpush1.msra.mxu0 0.0
        %1990 = vmatprep.subr.mxu0 0.0
        %1991 = vmatpush1.msra.mxu0 0.0
        %1992 = vmatprep.mubr.f32.mxu0 0.0
        %1993 = vmatmul.mubr.f32.gmra.mrb[0].mxu0 %v1923
        %v1994 = vpop.f32.mrb[0].mxu0
        %v1995 = vadd.f32 %v1920, %v1994
        %v1996 = vpop.f32.mrb[0].mxu0
        %1997 = vmatprep.mubr.f32.mxu0 0.0
        %1998 = vmatmul.mubr.f32.gmra.mrb[0].mxu0 %v1926
        %v1999 = vpop.f32.mrb[0].mxu0
        %v2000 = vadd.f32 %v1920, %v1999
        %v2001 = vpop.f32.mrb[0].mxu0
        %2002 = vdwg.mxu0
        %v2003 = vmul.f32 %v1995, 0.5
        %v2004 = vmul.f32 %v2000, 0.5
        %v2005 = vmul.f32 %v1995, 0.70710677
        %v2006 = vmul.f32 %v2000, 0.70710677
        %vm2007 = vcmp.ge.f32.partialorder %v2005, 0.0
        %vm2008 = vcmp.ge.f32.partialorder %v2006, 0.0
        %v2009 = vsel %vm2007, 1.0, -1.0
        %v2010 = vsel %vm2008, 1.0, -1.0
        %v2011 = vand.u32 2147483647, %v2005
        %v2012 = vand.u32 2147483647, %v2006
        %v2013 = vmul.f32 %v2011, 0.3275911
        %v2014 = vmul.f32 %v2012, 0.3275911
        %v2015 = vadd.f32 %v2013, 1.0
        %v2016 = vadd.f32 %v2014, 1.0
        %v2017 = vrcp.pop %v2015
        %v2018 = vmul.f32 1.0, %v2017
        %v2019 = vrcp.pop %v2016
        %v2020 = vmul.f32 1.0, %v2019
        %v2021 = vmul.f32 %v2018, 1.0614054
        %v2022 = vmul.f32 %v2020, 1.0614054
        %v2023 = vadd.f32 %v2021, -1.4531521
        %v2024 = vadd.f32 %v2022, -1.4531521
        %v2025 = vmul.f32 %v2023, %v2018
        %v2026 = vmul.f32 %v2024, %v2020
        %v2027 = vadd.f32 %v2025, 1.4214138
        %v2028 = vadd.f32 %v2026, 1.4214138
        %v2029 = vmul.f32 %v2027, %v2018
        %v2030 = vmul.f32 %v2028, %v2020
        %v2031 = vadd.f32 %v2029, -0.28449672
        %v2032 = vadd.f32 %v2030, -0.28449672
        %v2033 = vmul.f32 %v2031, %v2018
        %v2034 = vmul.f32 %v2032, %v2020
        %v2035 = vadd.f32 %v2033, 0.2548296
        %v2036 = vadd.f32 %v2034, 0.2548296
        %v2037 = vmul.f32 %v2035, %v2018
        %v2038 = vmul.f32 %v2036, %v2020
        %v2039 = vsub.f32 0.0, %v2011
        %v2040 = vsub.f32 0.0, %v2012
        %v2041 = vmul.f32 %v2039, %v2011
        %v2042 = vmul.f32 %v2040, %v2012
        %v2043 = vmul.f32 %v2041, 1.442695
        %v2044 = vpow.pop %v2043
        %v2045 = vmul.f32 %v2042, 1.442695
        %v2046 = vpow.pop %v2045
        %v2047 = vmul.f32 %v2037, %v2044
        %v2048 = vmul.f32 %v2038, %v2046
        %v2049 = vsub.f32 1.0, %v2047
        %v2050 = vsub.f32 1.0, %v2048
        %v2051 = vmul.f32 %v2009, %v2049
        %v2052 = vmul.f32 %v2010, %v2050
        %v2053 = vadd.f32 %v2051, 1.0
        %v2054 = vadd.f32 %v2052, 1.0
        %v2055 = vmul.f32 %v2003, %v2053
        %v2056 = vmul.f32 %v2004, %v2054
        %v2057 = vld [vmem:[%s15] sm:$0xff]
        %v2058 = vld [vmem:[%s15 + $0x8] sm:$0xff]
        %v2059 = vld [vmem:[%s15 + $0x10] sm:$0xff]
        %v2060 = vld [vmem:[%s15 + $0x18] sm:$0xff]
        %v2061 = vld [vmem:[%s15 + $0x20] sm:$0xff]
        %v2062 = vld [vmem:[%s15 + $0x28] sm:$0xff]
        %v2063 = vld [vmem:[%s15 + $0x30] sm:$0xff]
        %v2064 = vld [vmem:[%s15 + $0x38] sm:$0xff]
        %v2065 = vld [vmem:[%s15 + $0x40] sm:$0xff]
        %v2066 = vld [vmem:[%s15 + $0x48] sm:$0xff]
        %v2067 = vld [vmem:[%s15 + $0x50] sm:$0xff]
        %v2068 = vld [vmem:[%s15 + $0x58] sm:$0xff]
        %v2069 = vld [vmem:[%s15 + $0x60] sm:$0xff]
        %v2070 = vld [vmem:[%s15 + $0x68] sm:$0xff]
        %v2071 = vld [vmem:[%s15 + $0x70] sm:$0xff]
        %v2072 = vld [vmem:[%s15 + $0x78] sm:$0xff]
        %v2073 = vld [vmem:[%s16] sm:$0x1]
        %v2075 = vlaneseq
        %v2076 = vshrl.u32 %v2075, 7
        %v2077 = vsub.s32 0, %v2076
        %v2078 = vrot.slane %v2073, %v2077
        %2080 = vmatprep.subr.mxu0 0.0
        %2081 = vmatpush1.msra.mxu0 %v2057
        %2082 = vmatprep.subr.mxu0 0.0
        %2083 = vmatpush1.msra.mxu0 %v2058
        %2084 = vmatprep.subr.mxu0 0.0
        %2085 = vmatpush1.msra.mxu0 %v2059
        %2086 = vmatprep.subr.mxu0 0.0
        %2087 = vmatpush1.msra.mxu0 %v2060
        %2088 = vmatprep.subr.mxu0 0.0
        %2089 = vmatpush1.msra.mxu0 %v2061
        %2090 = vmatprep.subr.mxu0 0.0
        %2091 = vmatpush1.msra.mxu0 %v2062
        %2092 = vmatprep.subr.mxu0 0.0
        %2093 = vmatpush1.msra.mxu0 %v2063
        %2094 = vmatprep.subr.mxu0 0.0
        %2095 = vmatpush1.msra.mxu0 %v2064
        %2096 = vmatprep.subr.mxu0 0.0
        %2097 = vmatpush1.msra.mxu0 %v2065
        %2098 = vmatprep.subr.mxu0 0.0
        %2099 = vmatpush1.msra.mxu0 %v2066
        %2100 = vmatprep.subr.mxu0 0.0
        %2101 = vmatpush1.msra.mxu0 %v2067
        %2102 = vmatprep.subr.mxu0 0.0
        %2103 = vmatpush1.msra.mxu0 %v2068
        %2104 = vmatprep.subr.mxu0 0.0
        %2105 = vmatpush1.msra.mxu0 %v2069
        %2106 = vmatprep.subr.mxu0 0.0
        %2107 = vmatpush1.msra.mxu0 %v2070
        %2108 = vmatprep.subr.mxu0 0.0
        %2109 = vmatpush1.msra.mxu0 %v2071
        %2110 = vmatprep.subr.mxu0 0.0
        %2111 = vmatpush1.msra.mxu0 %v2072
        %2112 = vmatprep.subr.mxu0 0.0
        %2113 = vmatpush1.msra.mxu0 0.0
        %2114 = vmatprep.subr.mxu0 0.0
        %2115 = vmatpush1.msra.mxu0 0.0
        %2116 = vmatprep.subr.mxu0 0.0
        %2117 = vmatpush1.msra.mxu0 0.0
        %2118 = vmatprep.subr.mxu0 0.0
        %2119 = vmatpush1.msra.mxu0 0.0
        %2120 = vmatprep.subr.mxu0 0.0
        %2121 = vmatpush1.msra.mxu0 0.0
        %2122 = vmatprep.subr.mxu0 0.0
        %2123 = vmatpush1.msra.mxu0 0.0
        %2124 = vmatprep.subr.mxu0 0.0
        %2125 = vmatpush1.msra.mxu0 0.0
        %2126 = vmatprep.subr.mxu0 0.0
        %2127 = vmatpush1.msra.mxu0 0.0
        %2128 = vmatprep.subr.mxu0 0.0
        %2129 = vmatpush1.msra.mxu0 0.0
        %2130 = vmatprep.subr.mxu0 0.0
        %2131 = vmatpush1.msra.mxu0 0.0
        %2132 = vmatprep.subr.mxu0 0.0
        %2133 = vmatpush1.msra.mxu0 0.0
        %2134 = vmatprep.subr.mxu0 0.0
        %2135 = vmatpush1.msra.mxu0 0.0
        %2136 = vmatprep.subr.mxu0 0.0
        %2137 = vmatpush1.msra.mxu0 0.0
        %2138 = vmatprep.subr.mxu0 0.0
        %2139 = vmatpush1.msra.mxu0 0.0
        %2140 = vmatprep.subr.mxu0 0.0
        %2141 = vmatpush1.msra.mxu0 0.0
        %2142 = vmatprep.subr.mxu0 0.0
        %2143 = vmatpush1.msra.mxu0 0.0
        %2144 = vmatprep.mubr.f32.mxu0 0.0
        %2145 = vmatmul.mubr.f32.gmra.mrb[0].mxu0 %v2055
        %v2146 = vpop.f32.mrb[0].mxu0
        %v2147 = vadd.f32 %v2078, %v2146
        %v2148 = vpop.f32.mrb[0].mxu0
        %2149 = vmatprep.mubr.f32.mxu0 0.0
        %2150 = vmatmul.mubr.f32.gmra.mrb[0].mxu0 %v2056
        %v2151 = vpop.f32.mrb[0].mxu0
        %v2152 = vadd.f32 %v2078, %v2151
        %v2153 = vpop.f32.mrb[0].mxu0
        %2154 = vdwg.mxu0
        %v2155 = vadd.f32 %v1864, %v2147
        %v2156 = vadd.f32 %v1865, %v2152
        %2157 = vst.msk [vmem:[%s570] sm:$0xff] %vm831, %v2155
        %2158 = vst.msk [vmem:[%s570 + $0x8] sm:$0xff] %vm831, %v2156
        %s2159 = sand.u32 %s416, 1
        %s2160 = scalar_lea.sflag [#allocation8], %s2159
        %s2161 = sand.u32 %s416, 1
        %s2162 = smul.addr %s2161, 16
        %s2163 = scalar_lea.vmem [#allocation9], %s2162
        // Predicated region
        $region97: #{tpu_custom_call.1} parent=87 // pred_check
          %p2164 = pneg %p426
        $region98: #{tpu_custom_call.1} parent=87 // pred_check_branch
          %2166 = sbr.rel (%p2164) target = $region100
        $region99: #{tpu_custom_call.1} parent=87 // pred_region
          %s2167 = smul.u32 2, %s37
          %s2169 = ssub.s32 256, 256
          %2170 = vsyncadd %s2160, %s2169
          %s2171 = smul.addr %s36, 2
          %s2172 = sadd.s32 %s2167, %s2171
          %s2173 = smul.addr %s2172, 128
          %s2174 = scalar_lea.hbm %s17, %s2173
          %s2175 = sshll.u32 %s2163, 4
          %s2176 = int_to_ptr.vmem [resolvable:$true] %s2175
          %2181 = dma.vmem_to_hbm [thread:$0]  %s2176, 256, %s2174, %s2160, 128, 128, 8
        $region100: #{tpu_custom_call.1} parent=87 // pred_fallthru
          _
      $region88: #{tpu_custom_call.1} parent=5 // pred_fallthru
        _
      %p2182 = scmp.le.s32.totalorder 2, %s27
      // Predicated region
      $region101: #{tpu_custom_call.1} parent=5 // pred_check
        %p2183 = pneg %p2182
      $region102: #{tpu_custom_call.1} parent=5 // pred_check_branch
        %2185 = sbr.rel (%p2183) target = $region104
      $region103: #{tpu_custom_call.1} parent=5 // pred_region
        %s2186 = ssub.s32 %s27, 2
        // Predicated region
        $region105: #{tpu_custom_call.1} parent=103 // pred_check
          %p2187 = pneg %p432
        $region106: #{tpu_custom_call.1} parent=103 // pred_check_branch
          %2189 = sbr.rel (%p2187) target = $region108
        $region107: #{tpu_custom_call.1} parent=103 // pred_region
          %s2190 = sand.u32 %s417, 1
          %s2191 = scalar_lea.sflag [#allocation8], %s2190
          %s2192 = sand.u32 %s417, 1
          %s2193 = smul.addr %s2192, 16
          %s2194 = scalar_lea.vmem [#allocation9], %s2193
          %2195 = dma.done %s2191, 256
        $region108: #{tpu_custom_call.1} parent=103 // pred_fallthru
          _
      $region104: #{tpu_custom_call.1} parent=5 // pred_fallthru
        _
    $region6: #{tpu_custom_call.1} parent=1 // loop_footer
      %s31 = sadd.s32 1, %s27
    $region7: #{tpu_custom_call.1} parent=1 // loop_footer_branch
      %26 = sbr.rel target = $region3
    $region8: #{tpu_custom_call.1} parent=1 // loop_exit
      _
    %2196 = vsyncpa [#allocation7], 1
    %s2197 = scalar_lea.sflag [#allocation7], 1
    %2198 = vsyncpa %s2197, 1
    %2199 = vsyncpa [#allocation8], 1
    %s2200 = scalar_lea.sflag [#allocation8], 1
    %2201 = vsyncpa %s2200, 1

</llo_original>
